<compile_context>
chip_gen: v5e
topology: v5e:2x2
jax: 0.10.0
libtpu: 0.0.40
codegen_flags: <defaults>
</compile_context>

<pallas_src>
import functools

import jax
import jax.numpy as jnp
from jax.experimental import pallas as pl
from jax.experimental.pallas import tpu as pltpu


NUM_QUERIES = 8      # stand-in for 200 object queries
NUM_CLASSES = 10
CF = 64              # true fused-BEV channel width
CF_PAD = 128         # lane-dense padded width for the fused-feature output
HEAT_PAD = 128       # lane-dense padded width for the heatmap-logit output
# Explicit scoped-VMEM budget: tiles are sized so double-buffered inputs +
# resident weights + scratch stay well under v7x's 64 MiB physical VMEM.
VMEM_LIMIT = 32 * 1024 * 1024


def _round_up(x, m):
    return (x + m - 1) // m * m


def _pick_tile(total, candidates=(2048, 1024, 512, 256, 128, 64, 32, 16, 8)):
    """Largest row tile dividing `total` while keeping >=2 grid steps."""
    for c in candidates:
        if total % c == 0 and total // c >= 2:
            return c
    return total


def _pad2d(a, rows, cols):
    out = jnp.zeros((rows, cols), a.dtype)
    return out.at[: a.shape[0], : a.shape[1]].set(a)


# ----------------------------------------------------------------------------
# Generic row-tiled matmul + bias (+ activation) kernel (per-point MLP).
# ----------------------------------------------------------------------------
def _matmul_bias_kernel(x_ref, w_ref, b_ref, o_ref, *, activation):
    acc = jnp.dot(x_ref[...], w_ref[...], preferred_element_type=jnp.float32)
    acc = acc + b_ref[...]
    if activation == "relu":
        acc = jnp.maximum(acc, 0.0)
    o_ref[...] = acc.astype(o_ref.dtype)


def matmul_bias(x, w, b, activation="none"):
    """Row-tiled matmul+bias(+relu).  M is zero-padded up to a tile multiple,
    so a non-divisible row count never degenerates into one giant block."""
    M, K = x.shape
    N = w.shape[1]
    if M >= 1024:
        tm = 512
    elif M >= 16:
        tm = _round_up(M, 16) // 2     # >=2 tiles -> pipelining even at small M
    else:
        tm = 8
    tm = _round_up(tm, 8)
    Mp = int(pl.cdiv(M, tm)) * tm
    xp = jnp.pad(x, ((0, Mp - M), (0, 0))) if Mp != M else x
    kernel = functools.partial(_matmul_bias_kernel, activation=activation)
    out = pl.pallas_call(
        kernel,
        out_shape=jax.ShapeDtypeStruct((Mp, N), jnp.float32),
        grid=(Mp // tm,),
        in_specs=[
            pl.BlockSpec((tm, K), lambda i: (i, 0)),
            pl.BlockSpec((K, N), lambda i: (0, 0)),
            pl.BlockSpec((1, N), lambda i: (0, 0)),
        ],
        out_specs=pl.BlockSpec((tm, N), lambda i: (i, 0)),
        compiler_params=pltpu.CompilerParams(
            dimension_semantics=("parallel",), vmem_limit_bytes=VMEM_LIMIT),
    )(xp, w, b)
    return out[:M] if Mp != M else out


# ----------------------------------------------------------------------------
# Fused camera chain kernel.
# grid = (B, bev-row tile, Ncam*4).  The last (reduction) axis enumerates
# (camera, 2x2-pool subpixel) pairs; since the camera sum and the 2x2 average
# pool are both linear, they fold into one accumulation over that axis.
# TODO(synk): the real bev_pool scatters frustum points into BEV cells using
# geometry (get_geometry + cumsum trick) and consumes a lidar-projected depth
# map (utils.calculate_depth); depth is predicted from image features here and
# the scatter is replaced by this depth-weighted camera/subpixel reduction.
# ----------------------------------------------------------------------------
def _camera_kernel(patches_ref, w_img_ref, b_img_ref, w_dc_ref, b_dc_ref,
                   dweight_ref, w_down_ref, b_down_ref, o_ref, acc_ref,
                   *, depth_bins, cb):
    r = pl.program_id(2)

    # img_backbone projection (2x2 patch -> feature) + ReLU
    x = patches_ref[0]                                               # (Tw, 4*Cin) bf16
    feats = jnp.maximum(
        jnp.dot(x, w_img_ref[...], preferred_element_type=jnp.float32)
        + b_img_ref[...], 0.0)                                       # (Tw, Ci) f32

    # fused depth-logit + context head: one MXU push, lanes sliced in-register
    dc = (jnp.dot(feats.astype(w_dc_ref.dtype), w_dc_ref[...],
                  preferred_element_type=jnp.float32) + b_dc_ref[...])   # (Tw, D+Cb)
    dl = dc[:, :depth_bins]
    ctx = dc[:, depth_bins:depth_bins + cb]

    # softmax over depth bins -> depth-weighted scalar per pixel (f32 VPU/EUP)
    m = jnp.max(dl, axis=-1, keepdims=True)
    e = jnp.exp(dl - m)
    denom = jnp.sum(e, axis=-1, keepdims=True)
    wgt = (jnp.sum(e * dweight_ref[...], axis=-1, keepdims=True)
           * pl.reciprocal(denom, approx=True))                      # (Tw, 1)

    # bev pool camera-sum + 2x2 avg pool folded into one linear accumulation
    @pl.when(r == 0)
    def _():
        acc_ref[...] = jnp.zeros_like(acc_ref)
    acc_ref[...] += wgt * ctx

    # finalize: *1/4 (avg pool) then 1x1 downsample conv; single HBM store
    @pl.when(r == pl.num_programs(2) - 1)
    def _():
        pooled = (acc_ref[...] * 0.25).astype(w_down_ref.dtype)
        y = (jnp.dot(pooled, w_down_ref[...], preferred_element_type=jnp.float32)
             + b_down_ref[...])
        o_ref[0] = y.astype(o_ref.dtype)


def camera_chain(patches, prm, *, ncam):
    """img_backbone + vtransform (depth/context) + bev pool + downsample,
    fused into one pallas_call; only the final BEV map touches HBM."""
    B, M, Kin = patches.shape
    hw_cam = M // ncam                 # feature pixels per camera
    n_bev = hw_cam // 4                # BEV cells (= Hb*Wb)
    tw = _pick_tile(n_bev)             # BEV rows / pixels per grid step
    tiles = n_bev // tw
    nred = ncam * 4                    # (camera, pool subpixel) reduction steps
    depth_bins = prm["dweight"].shape[1]
    cb = prm["w_dc"].shape[1] - depth_bins
    co = prm["w_down"].shape[1]

    kernel = functools.partial(_camera_kernel, depth_bins=depth_bins, cb=cb)
    return pl.pallas_call(
        kernel,
        out_shape=jax.ShapeDtypeStruct((B, n_bev, co), jnp.bfloat16),
        grid=(B, tiles, nred),
        in_specs=[
            pl.BlockSpec((1, tw, Kin), lambda b, t, r: (b, r * tiles + t, 0)),
            pl.BlockSpec(prm["w_img"].shape, lambda b, t, r: (0, 0)),
            pl.BlockSpec(prm["b_img"].shape, lambda b, t, r: (0, 0)),
            pl.BlockSpec(prm["w_dc"].shape, lambda b, t, r: (0, 0)),
            pl.BlockSpec(prm["b_dc"].shape, lambda b, t, r: (0, 0)),
            pl.BlockSpec(prm["dweight"].shape, lambda b, t, r: (0, 0)),
            pl.BlockSpec(prm["w_down"].shape, lambda b, t, r: (0, 0)),
            pl.BlockSpec(prm["b_down"].shape, lambda b, t, r: (0, 0)),
        ],
        out_specs=pl.BlockSpec((1, tw, co), lambda b, t, r: (b, t, 0)),
        scratch_shapes=[pltpu.VMEM((tw, cb), jnp.float32)],
        compiler_params=pltpu.CompilerParams(
            dimension_semantics=("parallel", "parallel", "arbitrary"),
            vmem_limit_bytes=VMEM_LIMIT),
    )(patches, prm["w_img"], prm["b_img"], prm["w_dc"], prm["b_dc"],
      prm["dweight"], prm["w_down"], prm["b_down"])


# ----------------------------------------------------------------------------
# Fused fusion-conv + heatmap-head kernel, row-tiled over the BEV grid.
# img/pts BEV maps stay separate inputs (fusion weight split row-wise, so no
# HBM concat); both outputs are 128-lane-dense padded slabs.  The heatmap is
# emitted as LOGITS (sigmoid is monotonic, so top-k / argmax are unchanged).
# ----------------------------------------------------------------------------
def _fusion_head_kernel(img_ref, pts_ref, wfi_ref, wfp_ref, bf_ref, wh_ref,
                        bh_ref, fused_ref, heat_ref):
    acc = jnp.dot(img_ref[0], wfi_ref[...], preferred_element_type=jnp.float32)
    acc = acc + jnp.dot(pts_ref[0], wfp_ref[...], preferred_element_type=jnp.float32)
    fused = jnp.maximum(acc + bf_ref[...], 0.0)                      # (Tr, CF_PAD)
    heat = (jnp.dot(fused.astype(wh_ref.dtype), wh_ref[...],
                    preferred_element_type=jnp.float32) + bh_ref[...])  # (Tr, HEAT_PAD)
    fused_ref[0] = fused.astype(fused_ref.dtype)
    heat_ref[0] = heat.astype(heat_ref.dtype)


def fusion_head(img_bev, pts_bev, prm):
    B, hwb, cb = img_bev.shape
    cp = pts_bev.shape[-1]
    tr = _pick_tile(hwb)
    return pl.pallas_call(
        _fusion_head_kernel,
        out_shape=(jax.ShapeDtypeStruct((B, hwb, CF_PAD), jnp.float32),
                   jax.ShapeDtypeStruct((B, hwb, HEAT_PAD), jnp.float32)),
        grid=(B, hwb // tr),
        in_specs=[
            pl.BlockSpec((1, tr, cb), lambda b, t: (b, t, 0)),
            pl.BlockSpec((1, tr, cp), lambda b, t: (b, t, 0)),
            pl.BlockSpec(prm["w_fuse_img"].shape, lambda b, t: (0, 0)),
            pl.BlockSpec(prm["w_fuse_pts"].shape, lambda b, t: (0, 0)),
            pl.BlockSpec(prm["b_fuse"].shape, lambda b, t: (0, 0)),
            pl.BlockSpec(prm["w_heat"].shape, lambda b, t: (0, 0)),
            pl.BlockSpec(prm["b_heat"].shape, lambda b, t: (0, 0)),
        ],
        out_specs=(pl.BlockSpec((1, tr, CF_PAD), lambda b, t: (b, t, 0)),
                   pl.BlockSpec((1, tr, HEAT_PAD), lambda b, t: (b, t, 0))),
        compiler_params=pltpu.CompilerParams(
            dimension_semantics=("parallel", "parallel"),
            vmem_limit_bytes=VMEM_LIMIT),
    )(img_bev, pts_bev, prm["w_fuse_img"], prm["w_fuse_pts"], prm["b_fuse"],
      prm["w_heat"], prm["b_heat"])


# ----------------------------------------------------------------------------
# Parameters (deterministic synthetic init; small-scale stand-in shapes).
# ----------------------------------------------------------------------------
def init_params(key):
    ks = jax.random.split(key, 8)

    def w(k, shape, scale=0.1):
        return scale * jax.random.normal(k, shape, jnp.float32)

    return {
        "w_img": w(ks[0], (12, 32)),   "b_img": jnp.zeros((1, 32), jnp.float32),
        "w_depth": w(ks[1], (32, 8)),  "b_depth": jnp.zeros((1, 8), jnp.float32),
        "w_ctx": w(ks[2], (32, 16)),   "b_ctx": jnp.zeros((1, 16), jnp.float32),
        "dweight": jnp.linspace(0.2, 1.0, 8, dtype=jnp.float32).reshape(1, 8),
        "w_down": w(ks[3], (16, 16)),  "b_down": jnp.zeros((1, 16), jnp.float32),
        "w_pt": w(ks[4], (4, 16)),     "b_pt": jnp.zeros((1, 16), jnp.float32),
        "w_fuse": w(ks[5], (32, CF)),  "b_fuse": jnp.zeros((1, CF), jnp.float32),
        "w_heat": w(ks[6], (CF, NUM_CLASSES)),
        "b_heat": jnp.zeros((1, NUM_CLASSES), jnp.float32),
        # per-query heads fused: reg(2)+height(1)+dim(3)+rot(2)+vel(2)+cls(10)=20
        "w_q": w(ks[7], (CF, 20)),     "b_q": jnp.zeros((1, 20), jnp.float32),
    }


def prep_params(p):
    """Build kernel-ready constants ONCE, outside the jitted forward: bf16 MXU
    operands, fused depth+context weight, lane-dense padded fusion/head weights."""
    mm = jnp.bfloat16
    cb = p["w_down"].shape[1]          # img-BEV channels feeding fusion
    return {
        "w_img": p["w_img"].astype(mm),   "b_img": p["b_img"],
        "w_dc": jnp.concatenate([p["w_depth"], p["w_ctx"]], axis=1).astype(mm),
        "b_dc": jnp.concatenate([p["b_depth"], p["b_ctx"]], axis=1),
        "dweight": p["dweight"],
        "w_down": p["w_down"].astype(mm), "b_down": p["b_down"],
        "w_pt": p["w_pt"].astype(mm),     "b_pt": p["b_pt"],
        "w_fuse_img": _pad2d(p["w_fuse"][:cb], cb, CF_PAD).astype(mm),
        "w_fuse_pts": _pad2d(p["w_fuse"][cb:], p["w_fuse"].shape[0] - cb,
                             CF_PAD).astype(mm),
        "b_fuse": _pad2d(p["b_fuse"], 1, CF_PAD),
        "w_heat": _pad2d(p["w_heat"], CF_PAD, HEAT_PAD).astype(mm),
        "b_heat": _pad2d(p["b_heat"], 1, HEAT_PAD),
        "w_q": _pad2d(p["w_q"], CF_PAD, p["w_q"].shape[1]),
        "b_q": p["b_q"],
    }


def _patchify(imgs):
    """NCHW imgs -> (B, Ncam*4*Hb*Wb, 4*Cin) with pixel rows ordered by
    (camera, 2x2-pool subpixel, BEV cell) so the camera/pool reduction inside
    the Pallas kernel is plain block accumulation (no strided gathers)."""
    B, ncam, cin, H, W = imgs.shape
    hb, wb = H // 4, W // 4
    x = imgs.reshape(B, ncam, cin, hb, 2, 2, wb, 2, 2)
    #                 b   n    c   hb hp hi  wb wp wi
    x = jnp.transpose(x, (0, 1, 4, 7, 3, 6, 2, 5, 8))
    #                 b   n   hp  wp  hb wb  c  hi wi
    return x.reshape(B, ncam * 4 * hb * wb, cin * 4)


# ----------------------------------------------------------------------------
# Forward pass (mirrors BEVFusionTensorRTModel.forward dataflow).
# ----------------------------------------------------------------------------
def bevfusion_forward(imgs, points, prm):
    B, ncam, cin, H, W = imgs.shape
    hb, wb = H // 4, W // 4
    hwb = hb * wb

    # --- 1-4) fused camera chain: backbone + vtransform + bev pool + down ---
    patches = _patchify(imgs).astype(jnp.bfloat16)
    img_bev = camera_chain(patches, prm, ncam=ncam)          # (B, hwb, Cb) bf16

    # --- 5) lidar path: per-point MLP (Pallas) + pillar scatter-max (glue) ---
    # TODO(synk): hard voxelization + spconv sparse lidar backbone have no clean
    # Pallas equivalent; replaced by a PointNet-style per-point MLP followed by
    # a pillar scatter-max onto the BEV grid (data-dependent scatter kept in XLA).
    P = points.shape[1]
    pt_feat = matmul_bias(points.reshape(B * P, -1).astype(jnp.bfloat16),
                          prm["w_pt"], prm["b_pt"], activation="relu")
    cp = pt_feat.shape[-1]
    pt_feat = pt_feat.reshape(B, P, cp)
    pc_range = 54.0
    ix = jnp.clip(((points[..., 0] + pc_range) / (2 * pc_range) * wb).astype(jnp.int32), 0, wb - 1)
    iy = jnp.clip(((points[..., 1] + pc_range) / (2 * pc_range) * hb).astype(jnp.int32), 0, hb - 1)
    b_idx = jnp.broadcast_to(jnp.arange(B)[:, None], (B, P))
    # NOTE: zero init is only safe because pt_feat is post-ReLU (non-negative).
    pts_bev = jnp.zeros((B, hb, wb, cp), jnp.float32).at[b_idx, iy, ix].max(pt_feat)
    pts_bev = pts_bev.reshape(B, hwb, cp).astype(jnp.bfloat16)

    # --- 6-7a) fused fusion conv + heatmap head (lane-dense logit slabs) -----
    fused_pad, heat_pad = fusion_head(img_bev, pts_bev, prm)
    heat_logits = heat_pad[..., :NUM_CLASSES]                 # (B, hwb, ncls)

    # --- 7b) top-Q query selection + tiny per-query head (plain XLA; fuses) --
    cell_score = jnp.max(heat_logits, axis=-1)                # sigmoid monotonic
    _, top_idx = jax.lax.top_k(cell_score, NUM_QUERIES)       # (B, Q)
    q_feat = jnp.take_along_axis(fused_pad, top_idx[..., None], axis=1)  # (B,Q,CF_PAD)
    q_out = q_feat @ prm["w_q"] + prm["b_q"]                  # (B, Q, 20)

    # --- 8) decode (batched; mirrors utils.decode) ---------------------------
    bbox = jnp.concatenate(
        [q_out[..., 0:3],                 # reg (2) + height (1)
         jnp.exp(q_out[..., 3:6]),        # dim
         q_out[..., 6:10]],               # rot (2) + vel (2)
        axis=-1)                                              # (B, Q, 10)
    cls_logits = q_out[..., 10:10 + NUM_CLASSES]
    scores = jax.nn.sigmoid(jnp.max(cls_logits, axis=-1))     # (B, Q)
    labels = jnp.argmax(cls_logits, axis=-1).astype(jnp.float32)

    bboxes_3ds = [bbox[b] for b in range(B)]
    scores_3ds = [scores[b] for b in range(B)]
    labels_3ds = [labels[b] for b in range(B)]
    return bboxes_3ds, scores_3ds, labels_3ds


if __name__ == "__main__":
    key = jax.random.PRNGKey(0)
    k_img, k_xyz, k_int, k_prm = jax.random.split(key, 4)

    B, Ncam, H, W, P = 2, 2, 32, 32, 128
    imgs = jax.random.normal(k_img, (B, Ncam, 3, H, W), jnp.float32)
    xyz = jax.random.uniform(k_xyz, (B, P, 3), jnp.float32, minval=-54.0, maxval=54.0)
    intensity = jax.random.uniform(k_int, (B, P, 1), jnp.float32)
    points = jnp.concatenate([xyz, intensity], axis=-1)       # (B, P, 4)

    params = prep_params(init_params(k_prm))   # padded/fused constants built once
    fwd = jax.jit(bevfusion_forward)
    bboxes, scores, labels = fwd(imgs, points, params)
    jax.block_until_ready((bboxes, scores, labels))

    assert bboxes[0].shape == (NUM_QUERIES, 10)
    assert scores[0].shape == (NUM_QUERIES,)
    assert labels[0].shape == (NUM_QUERIES,)
    assert all(bool(jnp.all(jnp.isfinite(x))) for x in bboxes + scores + labels)
    print("KERNEL_OK")
</pallas_src>

<mosaic_0001>
module attributes {stable_mosaic.version = 11 : i64} {
  func.func @_camera_kernel(%arg0: i32, %arg1: i32, %arg2: i32, %arg3: memref<1x32x12xbf16, #tpu.memory_space<vmem>>, %arg4: memref<12x32xbf16, #tpu.memory_space<vmem>>, %arg5: memref<1x32xf32, #tpu.memory_space<vmem>>, %arg6: memref<32x24xbf16, #tpu.memory_space<vmem>>, %arg7: memref<1x24xf32, #tpu.memory_space<vmem>>, %arg8: memref<1x8xf32, #tpu.memory_space<vmem>>, %arg9: memref<16x16xbf16, #tpu.memory_space<vmem>>, %arg10: memref<1x16xf32, #tpu.memory_space<vmem>>, %arg11: memref<1x32x16xbf16, #tpu.memory_space<vmem>>, %arg12: memref<32x16xf32, #tpu.memory_space<vmem>>) attributes {dimension_semantics = [#tpu.dimension_semantics<parallel>, #tpu.dimension_semantics<parallel>, #tpu.dimension_semantics<arbitrary>], iteration_bounds = array<i64: 2, 2, 8>, scalar_prefetch = 0 : i64, scratch_operands = 1 : i64, tpu.core_type = #tpu.core_type<tc>, window_params = [{transform_indices = @transform_0, window_bounds = array<i64: 1, 32, 12>}, {pipeline_mode = #tpu.pipeline_mode<synchronous>, transform_indices = @transform_1, window_bounds = array<i64: 12, 32>}, {pipeline_mode = #tpu.pipeline_mode<synchronous>, transform_indices = @transform_2, window_bounds = array<i64: 1, 32>}, {pipeline_mode = #tpu.pipeline_mode<synchronous>, transform_indices = @transform_3, window_bounds = array<i64: 32, 24>}, {pipeline_mode = #tpu.pipeline_mode<synchronous>, transform_indices = @transform_4, window_bounds = array<i64: 1, 24>}, {pipeline_mode = #tpu.pipeline_mode<synchronous>, transform_indices = @transform_5, window_bounds = array<i64: 1, 8>}, {pipeline_mode = #tpu.pipeline_mode<synchronous>, transform_indices = @transform_6, window_bounds = array<i64: 16, 16>}, {pipeline_mode = #tpu.pipeline_mode<synchronous>, transform_indices = @transform_7, window_bounds = array<i64: 1, 16>}, {transform_indices = @transform_8, window_bounds = array<i64: 1, 32, 16>}]} {
    %c0 = arith.constant 0 : index
    %c0_0 = arith.constant 0 : index
    %c0_1 = arith.constant 0 : index
    %0 = vector.load %arg3[%c0, %c0_0, %c0_1] : memref<1x32x12xbf16, #tpu.memory_space<vmem>>, vector<1x32x12xbf16>
    %1 = vector.shape_cast %0 : vector<1x32x12xbf16> to vector<32x12xbf16>
    %c0_2 = arith.constant 0 : index
    %c0_3 = arith.constant 0 : index
    %2 = vector.load %arg4[%c0_2, %c0_3] : memref<12x32xbf16, #tpu.memory_space<vmem>>, vector<12x32xbf16>
    %cst = arith.constant dense<0.000000e+00> : vector<32x32xf32>
    %3 = tpu.matmul %1, %2, %cst {dimension_numbers = #tpu.dot_dimension_numbers<[1], [0], [0], [1], [0, 0, 1, 1], [], []>} : vector<32x12xbf16>, vector<12x32xbf16>, vector<32x32xf32> -> vector<32x32xf32>
    %c0_4 = arith.constant 0 : index
    %c0_5 = arith.constant 0 : index
    %4 = vector.load %arg5[%c0_4, %c0_5] : memref<1x32xf32, #tpu.memory_space<vmem>>, vector<1x32xf32>
    %5 = vector.broadcast %4 : vector<1x32xf32> to vector<32x32xf32>
    %6 = arith.addf %3, %5 : vector<32x32xf32>
    %cst_6 = arith.constant 0.000000e+00 : f32
    %7 = vector.broadcast %cst_6 : f32 to vector<32x32xf32>
    %8 = arith.maximumf %6, %7 : vector<32x32xf32>
    %9 = arith.truncf %8 : vector<32x32xf32> to vector<32x32xbf16>
    %c0_7 = arith.constant 0 : index
    %c0_8 = arith.constant 0 : index
    %10 = vector.load %arg6[%c0_7, %c0_8] : memref<32x24xbf16, #tpu.memory_space<vmem>>, vector<32x24xbf16>
    %cst_9 = arith.constant dense<0.000000e+00> : vector<32x24xf32>
    %11 = tpu.matmul %9, %10, %cst_9 {dimension_numbers = #tpu.dot_dimension_numbers<[1], [0], [0], [1], [0, 0, 1, 1], [], []>} : vector<32x32xbf16>, vector<32x24xbf16>, vector<32x24xf32> -> vector<32x24xf32>
    %c0_10 = arith.constant 0 : index
    %c0_11 = arith.constant 0 : index
    %12 = vector.load %arg7[%c0_10, %c0_11] : memref<1x24xf32, #tpu.memory_space<vmem>>, vector<1x24xf32>
    %13 = vector.broadcast %12 : vector<1x24xf32> to vector<32x24xf32>
    %14 = arith.addf %11, %13 : vector<32x24xf32>
    %15 = vector.extract_strided_slice %14 {offsets = [0, 0], sizes = [32, 8], strides = [1, 1]} : vector<32x24xf32> to vector<32x8xf32>
    %16 = vector.extract_strided_slice %14 {offsets = [0, 8], sizes = [32, 16], strides = [1, 1]} : vector<32x24xf32> to vector<32x16xf32>
    %cst_12 = arith.constant dense<0xFF800000> : vector<32xf32>
    %17 = vector.multi_reduction <maximumf>, %15, %cst_12 [1] : vector<32x8xf32> to vector<32xf32>
    %18 = vector.shape_cast %17 : vector<32xf32> to vector<32x1xf32>
    %19 = vector.broadcast %18 : vector<32x1xf32> to vector<32x8xf32>
    %20 = arith.subf %15, %19 : vector<32x8xf32>
    %21 = math.exp %20 : vector<32x8xf32>
    %cst_13 = arith.constant dense<0.000000e+00> : vector<32xf32>
    %22 = vector.multi_reduction <add>, %21, %cst_13 [1] : vector<32x8xf32> to vector<32xf32>
    %23 = vector.shape_cast %22 : vector<32xf32> to vector<32x1xf32>
    %c0_14 = arith.constant 0 : index
    %c0_15 = arith.constant 0 : index
    %24 = vector.load %arg8[%c0_14, %c0_15] : memref<1x8xf32, #tpu.memory_space<vmem>>, vector<1x8xf32>
    %25 = vector.broadcast %24 : vector<1x8xf32> to vector<32x8xf32>
    %26 = arith.mulf %21, %25 : vector<32x8xf32>
    %cst_16 = arith.constant dense<0.000000e+00> : vector<32xf32>
    %27 = vector.multi_reduction <add>, %26, %cst_16 [1] : vector<32x8xf32> to vector<32xf32>
    %28 = vector.shape_cast %27 : vector<32xf32> to vector<32x1xf32>
    %29 = tpu.reciprocal %23 {approx = true} : vector<32x1xf32> -> vector<32x1xf32>
    %30 = arith.mulf %28, %29 : vector<32x1xf32>
    %c0_i32 = arith.constant 0 : i32
    %31 = arith.cmpi eq, %arg2, %c0_i32 : i32
    %32 = arith.extui %31 : i1 to i32
    %c0_i32_17 = arith.constant 0 : i32
    %33 = arith.cmpi ne, %32, %c0_i32_17 : i32
    scf.if %33 {
      %cst_23 = arith.constant 0.000000e+00 : f32
      %42 = vector.broadcast %cst_23 : f32 to vector<32x16xf32>
      %c0_24 = arith.constant 0 : index
      %c0_25 = arith.constant 0 : index
      %43 = vector.load %arg12[%c0_24, %c0_25] : memref<32x16xf32, #tpu.memory_space<vmem>>, vector<32x16xf32>
      tpu.vector_store %arg12[%c0_24, %c0_25], %42 {strides = array<i32>} : memref<32x16xf32, #tpu.memory_space<vmem>>, vector<32x16xf32>,
    } else {
    }
    %c0_18 = arith.constant 0 : index
    %c0_19 = arith.constant 0 : index
    %34 = vector.load %arg12[%c0_18, %c0_19] : memref<32x16xf32, #tpu.memory_space<vmem>>, vector<32x16xf32>
    %35 = vector.broadcast %30 : vector<32x1xf32> to vector<32x16xf32>
    %36 = arith.mulf %35, %16 : vector<32x16xf32>
    %37 = arith.addf %34, %36 : vector<32x16xf32>
    %c0_20 = arith.constant 0 : index
    %c0_21 = arith.constant 0 : index
    %38 = vector.load %arg12[%c0_20, %c0_21] : memref<32x16xf32, #tpu.memory_space<vmem>>, vector<32x16xf32>
    tpu.vector_store %arg12[%c0_20, %c0_21], %37 {strides = array<i32>} : memref<32x16xf32, #tpu.memory_space<vmem>>, vector<32x16xf32>,
    %c7_i32 = arith.constant 7 : i32
    %39 = arith.cmpi eq, %arg2, %c7_i32 : i32
    %40 = arith.extui %39 : i1 to i32
    %c0_i32_22 = arith.constant 0 : i32
    %41 = arith.cmpi ne, %40, %c0_i32_22 : i32
    scf.if %41 {
      %c0_23 = arith.constant 0 : index
      %c0_24 = arith.constant 0 : index
      %42 = vector.load %arg12[%c0_23, %c0_24] : memref<32x16xf32, #tpu.memory_space<vmem>>, vector<32x16xf32>
      %cst_25 = arith.constant 2.500000e-01 : f32
      %43 = vector.broadcast %cst_25 : f32 to vector<32x16xf32>
      %44 = arith.mulf %42, %43 : vector<32x16xf32>
      %45 = arith.truncf %44 : vector<32x16xf32> to vector<32x16xbf16>
      %c0_26 = arith.constant 0 : index
      %c0_27 = arith.constant 0 : index
      %46 = vector.load %arg9[%c0_26, %c0_27] : memref<16x16xbf16, #tpu.memory_space<vmem>>, vector<16x16xbf16>
      %cst_28 = arith.constant dense<0.000000e+00> : vector<32x16xf32>
      %47 = tpu.matmul %45, %46, %cst_28 {dimension_numbers = #tpu.dot_dimension_numbers<[1], [0], [0], [1], [0, 0, 1, 1], [], []>} : vector<32x16xbf16>, vector<16x16xbf16>, vector<32x16xf32> -> vector<32x16xf32>
      %c0_29 = arith.constant 0 : index
      %c0_30 = arith.constant 0 : index
      %48 = vector.load %arg10[%c0_29, %c0_30] : memref<1x16xf32, #tpu.memory_space<vmem>>, vector<1x16xf32>
      %49 = vector.broadcast %48 : vector<1x16xf32> to vector<32x16xf32>
      %50 = arith.addf %47, %49 : vector<32x16xf32>
      %51 = arith.truncf %50 : vector<32x16xf32> to vector<32x16xbf16>
      %c0_31 = arith.constant 0 : index
      %c0_32 = arith.constant 0 : index
      %c0_33 = arith.constant 0 : index
      %52 = vector.load %arg11[%c0_31, %c0_32, %c0_33] : memref<1x32x16xbf16, #tpu.memory_space<vmem>>, vector<1x32x16xbf16>
      %53 = vector.shape_cast %52 : vector<1x32x16xbf16> to vector<32x16xbf16>
      %54 = vector.shape_cast %51 : vector<32x16xbf16> to vector<1x32x16xbf16>
      tpu.vector_store %arg11[%c0_31, %c0_32, %c0_33], %54 {strides = array<i32>} : memref<1x32x16xbf16, #tpu.memory_space<vmem>>, vector<1x32x16xbf16>,
    } else {
    }
    return
  }
  func.func @transform_0(%arg0: i32, %arg1: i32, %arg2: i32) -> (i32, i32, i32) {
    %c2_i32 = arith.constant 2 : i32
    %0 = arith.muli %arg2, %c2_i32 : i32
    %1 = arith.addi %0, %arg1 : i32
    %c0_i32 = arith.constant 0 : i32
    %c0_i32_0 = arith.constant 0 : i32
    return %arg0, %1, %c0_i32 : i32, i32, i32
  }
  func.func @transform_1(%arg0: i32, %arg1: i32, %arg2: i32) -> (i32, i32) {
    %c0_i32 = arith.constant 0 : i32
    %c0_i32_0 = arith.constant 0 : i32
    %c0_i32_1 = arith.constant 0 : i32
    return %c0_i32, %c0_i32_0 : i32, i32
  }
  func.func @transform_2(%arg0: i32, %arg1: i32, %arg2: i32) -> (i32, i32) {
    %c0_i32 = arith.constant 0 : i32
    %c0_i32_0 = arith.constant 0 : i32
    %c0_i32_1 = arith.constant 0 : i32
    return %c0_i32, %c0_i32_0 : i32, i32
  }
  func.func @transform_3(%arg0: i32, %arg1: i32, %arg2: i32) -> (i32, i32) {
    %c0_i32 = arith.constant 0 : i32
    %c0_i32_0 = arith.constant 0 : i32
    %c0_i32_1 = arith.constant 0 : i32
    return %c0_i32, %c0_i32_0 : i32, i32
  }
  func.func @transform_4(%arg0: i32, %arg1: i32, %arg2: i32) -> (i32, i32) {
    %c0_i32 = arith.constant 0 : i32
    %c0_i32_0 = arith.constant 0 : i32
    %c0_i32_1 = arith.constant 0 : i32
    return %c0_i32, %c0_i32_0 : i32, i32
  }
  func.func @transform_5(%arg0: i32, %arg1: i32, %arg2: i32) -> (i32, i32) {
    %c0_i32 = arith.constant 0 : i32
    %c0_i32_0 = arith.constant 0 : i32
    %c0_i32_1 = arith.constant 0 : i32
    return %c0_i32, %c0_i32_0 : i32, i32
  }
  func.func @transform_6(%arg0: i32, %arg1: i32, %arg2: i32) -> (i32, i32) {
    %c0_i32 = arith.constant 0 : i32
    %c0_i32_0 = arith.constant 0 : i32
    %c0_i32_1 = arith.constant 0 : i32
    return %c0_i32, %c0_i32_0 : i32, i32
  }
  func.func @transform_7(%arg0: i32, %arg1: i32, %arg2: i32) -> (i32, i32) {
    %c0_i32 = arith.constant 0 : i32
    %c0_i32_0 = arith.constant 0 : i32
    %c0_i32_1 = arith.constant 0 : i32
    return %c0_i32, %c0_i32_0 : i32, i32
  }
  func.func @transform_8(%arg0: i32, %arg1: i32, %arg2: i32) -> (i32, i32, i32) {
    %c0_i32 = arith.constant 0 : i32
    %c0_i32_0 = arith.constant 0 : i32
    return %arg0, %arg1, %c0_i32 : i32, i32, i32
  }
}

module attributes {stable_mosaic.version = 11 : i64} {
  func.func @_matmul_bias_kernel(%arg0: i32, %arg1: memref<128x4xbf16, #tpu.memory_space<vmem>>, %arg2: memref<4x16xbf16, #tpu.memory_space<vmem>>, %arg3: memref<1x16xf32, #tpu.memory_space<vmem>>, %arg4: memref<128x16xf32, #tpu.memory_space<vmem>>) attributes {dimension_semantics = [#tpu.dimension_semantics<parallel>], iteration_bounds = array<i64: 2>, scalar_prefetch = 0 : i64, scratch_operands = 0 : i64, tpu.core_type = #tpu.core_type<tc>, window_params = [{transform_indices = @transform_0, window_bounds = array<i64: 128, 4>}, {pipeline_mode = #tpu.pipeline_mode<synchronous>, transform_indices = @transform_1, window_bounds = array<i64: 4, 16>}, {pipeline_mode = #tpu.pipeline_mode<synchronous>, transform_indices = @transform_2, window_bounds = array<i64: 1, 16>}, {transform_indices = @transform_3, window_bounds = array<i64: 128, 16>}]} {
    %c0 = arith.constant 0 : index
    %c0_0 = arith.constant 0 : index
    %0 = vector.load %arg1[%c0, %c0_0] : memref<128x4xbf16, #tpu.memory_space<vmem>>, vector<128x4xbf16>
    %c0_1 = arith.constant 0 : index
    %c0_2 = arith.constant 0 : index
    %1 = vector.load %arg2[%c0_1, %c0_2] : memref<4x16xbf16, #tpu.memory_space<vmem>>, vector<4x16xbf16>
    %cst = arith.constant dense<0.000000e+00> : vector<128x16xf32>
    %2 = tpu.matmul %0, %1, %cst {dimension_numbers = #tpu.dot_dimension_numbers<[1], [0], [0], [1], [0, 0, 1, 1], [], []>} : vector<128x4xbf16>, vector<4x16xbf16>, vector<128x16xf32> -> vector<128x16xf32>
    %c0_3 = arith.constant 0 : index
    %c0_4 = arith.constant 0 : index
    %3 = vector.load %arg3[%c0_3, %c0_4] : memref<1x16xf32, #tpu.memory_space<vmem>>, vector<1x16xf32>
    %4 = vector.broadcast %3 : vector<1x16xf32> to vector<128x16xf32>
    %5 = arith.addf %2, %4 : vector<128x16xf32>
    %cst_5 = arith.constant 0.000000e+00 : f32
    %6 = vector.broadcast %cst_5 : f32 to vector<128x16xf32>
    %7 = arith.maximumf %5, %6 : vector<128x16xf32>
    %c0_6 = arith.constant 0 : index
    %c0_7 = arith.constant 0 : index
    %8 = vector.load %arg4[%c0_6, %c0_7] : memref<128x16xf32, #tpu.memory_space<vmem>>, vector<128x16xf32>
    tpu.vector_store %arg4[%c0_6, %c0_7], %7 {strides = array<i32>} : memref<128x16xf32, #tpu.memory_space<vmem>>, vector<128x16xf32>,
    return
  }
  func.func @transform_0(%arg0: i32) -> (i32, i32) {
    %c0_i32 = arith.constant 0 : i32
    %c0_i32_0 = arith.constant 0 : i32
    return %arg0, %c0_i32 : i32, i32
  }
  func.func @transform_1(%arg0: i32) -> (i32, i32) {
    %c0_i32 = arith.constant 0 : i32
    %c0_i32_0 = arith.constant 0 : i32
    %c0_i32_1 = arith.constant 0 : i32
    return %c0_i32, %c0_i32_0 : i32, i32
  }
  func.func @transform_2(%arg0: i32) -> (i32, i32) {
    %c0_i32 = arith.constant 0 : i32
    %c0_i32_0 = arith.constant 0 : i32
    %c0_i32_1 = arith.constant 0 : i32
    return %c0_i32, %c0_i32_0 : i32, i32
  }
  func.func @transform_3(%arg0: i32) -> (i32, i32) {
    %c0_i32 = arith.constant 0 : i32
    %c0_i32_0 = arith.constant 0 : i32
    return %arg0, %c0_i32 : i32, i32
  }
}

module attributes {stable_mosaic.version = 11 : i64} {
  func.func @_fusion_head_kernel(%arg0: i32, %arg1: i32, %arg2: memref<1x32x16xbf16, #tpu.memory_space<vmem>>, %arg3: memref<1x32x16xbf16, #tpu.memory_space<vmem>>, %arg4: memref<16x128xbf16, #tpu.memory_space<vmem>>, %arg5: memref<16x128xbf16, #tpu.memory_space<vmem>>, %arg6: memref<1x128xf32, #tpu.memory_space<vmem>>, %arg7: memref<128x128xbf16, #tpu.memory_space<vmem>>, %arg8: memref<1x128xf32, #tpu.memory_space<vmem>>, %arg9: memref<1x32x128xf32, #tpu.memory_space<vmem>>, %arg10: memref<1x32x128xf32, #tpu.memory_space<vmem>>) attributes {dimension_semantics = [#tpu.dimension_semantics<parallel>, #tpu.dimension_semantics<parallel>], iteration_bounds = array<i64: 2, 2>, scalar_prefetch = 0 : i64, scratch_operands = 0 : i64, tpu.core_type = #tpu.core_type<tc>, window_params = [{transform_indices = @transform_0, window_bounds = array<i64: 1, 32, 16>}, {transform_indices = @transform_1, window_bounds = array<i64: 1, 32, 16>}, {pipeline_mode = #tpu.pipeline_mode<synchronous>, transform_indices = @transform_2, window_bounds = array<i64: 16, 128>}, {pipeline_mode = #tpu.pipeline_mode<synchronous>, transform_indices = @transform_3, window_bounds = array<i64: 16, 128>}, {pipeline_mode = #tpu.pipeline_mode<synchronous>, transform_indices = @transform_4, window_bounds = array<i64: 1, 128>}, {pipeline_mode = #tpu.pipeline_mode<synchronous>, transform_indices = @transform_5, window_bounds = array<i64: 128, 128>}, {pipeline_mode = #tpu.pipeline_mode<synchronous>, transform_indices = @transform_6, window_bounds = array<i64: 1, 128>}, {transform_indices = @transform_7, window_bounds = array<i64: 1, 32, 128>}, {transform_indices = @transform_8, window_bounds = array<i64: 1, 32, 128>}]} {
    %c0 = arith.constant 0 : index
    %c0_0 = arith.constant 0 : index
    %c0_1 = arith.constant 0 : index
    %0 = vector.load %arg2[%c0, %c0_0, %c0_1] : memref<1x32x16xbf16, #tpu.memory_space<vmem>>, vector<1x32x16xbf16>
    %1 = vector.shape_cast %0 : vector<1x32x16xbf16> to vector<32x16xbf16>
    %c0_2 = arith.constant 0 : index
    %c0_3 = arith.constant 0 : index
    %2 = vector.load %arg4[%c0_2, %c0_3] : memref<16x128xbf16, #tpu.memory_space<vmem>>, vector<16x128xbf16>
    %cst = arith.constant dense<0.000000e+00> : vector<32x128xf32>
    %3 = tpu.matmul %1, %2, %cst {dimension_numbers = #tpu.dot_dimension_numbers<[1], [0], [0], [1], [0, 0, 1, 1], [], []>} : vector<32x16xbf16>, vector<16x128xbf16>, vector<32x128xf32> -> vector<32x128xf32>
    %c0_4 = arith.constant 0 : index
    %c0_5 = arith.constant 0 : index
    %c0_6 = arith.constant 0 : index
    %4 = vector.load %arg3[%c0_4, %c0_5, %c0_6] : memref<1x32x16xbf16, #tpu.memory_space<vmem>>, vector<1x32x16xbf16>
    %5 = vector.shape_cast %4 : vector<1x32x16xbf16> to vector<32x16xbf16>
    %c0_7 = arith.constant 0 : index
    %c0_8 = arith.constant 0 : index
    %6 = vector.load %arg5[%c0_7, %c0_8] : memref<16x128xbf16, #tpu.memory_space<vmem>>, vector<16x128xbf16>
    %cst_9 = arith.constant dense<0.000000e+00> : vector<32x128xf32>
    %7 = tpu.matmul %5, %6, %cst_9 {dimension_numbers = #tpu.dot_dimension_numbers<[1], [0], [0], [1], [0, 0, 1, 1], [], []>} : vector<32x16xbf16>, vector<16x128xbf16>, vector<32x128xf32> -> vector<32x128xf32>
    %8 = arith.addf %3, %7 : vector<32x128xf32>
    %c0_10 = arith.constant 0 : index
    %c0_11 = arith.constant 0 : index
    %9 = vector.load %arg6[%c0_10, %c0_11] : memref<1x128xf32, #tpu.memory_space<vmem>>, vector<1x128xf32>
    %10 = vector.broadcast %9 : vector<1x128xf32> to vector<32x128xf32>
    %11 = arith.addf %8, %10 : vector<32x128xf32>
    %cst_12 = arith.constant 0.000000e+00 : f32
    %12 = vector.broadcast %cst_12 : f32 to vector<32x128xf32>
    %13 = arith.maximumf %11, %12 : vector<32x128xf32>
    %14 = arith.truncf %13 : vector<32x128xf32> to vector<32x128xbf16>
    %c0_13 = arith.constant 0 : index
    %c0_14 = arith.constant 0 : index
    %15 = vector.load %arg7[%c0_13, %c0_14] : memref<128x128xbf16, #tpu.memory_space<vmem>>, vector<128x128xbf16>
    %cst_15 = arith.constant dense<0.000000e+00> : vector<32x128xf32>
    %16 = tpu.matmul %14, %15, %cst_15 {dimension_numbers = #tpu.dot_dimension_numbers<[1], [0], [0], [1], [0, 0, 1, 1], [], []>} : vector<32x128xbf16>, vector<128x128xbf16>, vector<32x128xf32> -> vector<32x128xf32>
    %c0_16 = arith.constant 0 : index
    %c0_17 = arith.constant 0 : index
    %17 = vector.load %arg8[%c0_16, %c0_17] : memref<1x128xf32, #tpu.memory_space<vmem>>, vector<1x128xf32>
    %18 = vector.broadcast %17 : vector<1x128xf32> to vector<32x128xf32>
    %19 = arith.addf %16, %18 : vector<32x128xf32>
    %c0_18 = arith.constant 0 : index
    %c0_19 = arith.constant 0 : index
    %c0_20 = arith.constant 0 : index
    %20 = vector.load %arg9[%c0_18, %c0_19, %c0_20] : memref<1x32x128xf32, #tpu.memory_space<vmem>>, vector<1x32x128xf32>
    %21 = vector.shape_cast %20 : vector<1x32x128xf32> to vector<32x128xf32>
    %22 = vector.shape_cast %13 : vector<32x128xf32> to vector<1x32x128xf32>
    tpu.vector_store %arg9[%c0_18, %c0_19, %c0_20], %22 {strides = array<i32>} : memref<1x32x128xf32, #tpu.memory_space<vmem>>, vector<1x32x128xf32>,
    %c0_21 = arith.constant 0 : index
    %c0_22 = arith.constant 0 : index
    %c0_23 = arith.constant 0 : index
    %23 = vector.load %arg10[%c0_21, %c0_22, %c0_23] : memref<1x32x128xf32, #tpu.memory_space<vmem>>, vector<1x32x128xf32>
    %24 = vector.shape_cast %23 : vector<1x32x128xf32> to vector<32x128xf32>
    %25 = vector.shape_cast %19 : vector<32x128xf32> to vector<1x32x128xf32>
    tpu.vector_store %arg10[%c0_21, %c0_22, %c0_23], %25 {strides = array<i32>} : memref<1x32x128xf32, #tpu.memory_space<vmem>>, vector<1x32x128xf32>,
    return
  }
  func.func @transform_0(%arg0: i32, %arg1: i32) -> (i32, i32, i32) {
    %c0_i32 = arith.constant 0 : i32
    %c0_i32_0 = arith.constant 0 : i32
    return %arg0, %arg1, %c0_i32 : i32, i32, i32
  }
  func.func @transform_1(%arg0: i32, %arg1: i32) -> (i32, i32, i32) {
    %c0_i32 = arith.constant 0 : i32
    %c0_i32_0 = arith.constant 0 : i32
    return %arg0, %arg1, %c0_i32 : i32, i32, i32
  }
  func.func @transform_2(%arg0: i32, %arg1: i32) -> (i32, i32) {
    %c0_i32 = arith.constant 0 : i32
    %c0_i32_0 = arith.constant 0 : i32
    %c0_i32_1 = arith.constant 0 : i32
    return %c0_i32, %c0_i32_0 : i32, i32
  }
  func.func @transform_3(%arg0: i32, %arg1: i32) -> (i32, i32) {
    %c0_i32 = arith.constant 0 : i32
    %c0_i32_0 = arith.constant 0 : i32
    %c0_i32_1 = arith.constant 0 : i32
    return %c0_i32, %c0_i32_0 : i32, i32
  }
  func.func @transform_4(%arg0: i32, %arg1: i32) -> (i32, i32) {
    %c0_i32 = arith.constant 0 : i32
    %c0_i32_0 = arith.constant 0 : i32
    %c0_i32_1 = arith.constant 0 : i32
    return %c0_i32, %c0_i32_0 : i32, i32
  }
  func.func @transform_5(%arg0: i32, %arg1: i32) -> (i32, i32) {
    %c0_i32 = arith.constant 0 : i32
    %c0_i32_0 = arith.constant 0 : i32
    %c0_i32_1 = arith.constant 0 : i32
    return %c0_i32, %c0_i32_0 : i32, i32
  }
  func.func @transform_6(%arg0: i32, %arg1: i32) -> (i32, i32) {
    %c0_i32 = arith.constant 0 : i32
    %c0_i32_0 = arith.constant 0 : i32
    %c0_i32_1 = arith.constant 0 : i32
    return %c0_i32, %c0_i32_0 : i32, i32
  }
  func.func @transform_7(%arg0: i32, %arg1: i32) -> (i32, i32, i32) {
    %c0_i32 = arith.constant 0 : i32
    %c0_i32_0 = arith.constant 0 : i32
    return %arg0, %arg1, %c0_i32 : i32, i32, i32
  }
  func.func @transform_8(%arg0: i32, %arg1: i32) -> (i32, i32, i32) {
    %c0_i32 = arith.constant 0 : i32
    %c0_i32_0 = arith.constant 0 : i32
    return %arg0, %arg1, %c0_i32 : i32, i32, i32
  }
}

</mosaic_0001>

<llo_original>
// kernel: bevfusion_forward.4
$region0: #{bevfusion_forward.4}
  #allocation0 [shape = 'u32[]', space=smem, size = 0x4, offset = 0x4, fixed_abs, tag = 'smem constant byte address 0x4 - core index']
  #allocation1 [shape = 'u32[72,128]{1,0:T(1,128)}', space=vmem, size = 0x9000, scoped, tag = 'internal scratch']
  %s0 = inlined_call_operand.vmem [shape: bf16[256,4], index: 0, kind: input, shape index: {}]
  %s1 = inlined_call_operand.vmem [shape: bf16[4,16], index: 1, kind: input, shape index: {}]
  %s2 = inlined_call_operand.vmem [shape: f32[1,16], index: 2, kind: input, shape index: {}]
  %s3 = inlined_call_operand.vmem [shape: f32[256,16], index: 3, kind: output, shape index: {}]
  %s4 = sld [smem:[#allocation0]]
  $region45: #{bevfusion_forward.4} parent=0
    _
  %s6 = ssub.s32 1, %s4
  %s7 = scalar_select 0, %s6, %s4
  loop: start=0, step=1, limit=4
  $region2: #{bevfusion_forward.4} parent=0 // loop_pre_header
    _
  $region3: #{bevfusion_forward.4} parent=0 // loop_header
    %s9 = sphi 0, %s13
    %p10 = scmp.ge.s32.totalorder %s9, 4
    %s19 = sphi 0, %s21
    %s22 = sphi 0, %s19
    %s23 = sphi 0, %s22
    %s39 = sphi 0, %s23
    %s43 = sphi 0, %s43
    %s45 = sphi 0, %s43
    %s46 = sphi 0, %s45
    %s60 = sphi 0, %s46
    %s64 = sphi 0, %s64
    %s66 = sphi 0, %s64
    %s67 = sphi 0, %s66
    %s81 = sphi 0, %s67
    %s87 = sphi 0, %s89
    %s90 = sphi 0, %s87
    %s91 = sphi 0, %s90
    %s107 = sphi 0, %s91
  $region4: #{bevfusion_forward.4} parent=0 // loop_header_branch
    %12 = sbr.rel (%p10) target = $region8
  $region5: #{bevfusion_forward.4} parent=0 // loop_body
    %s14 = ssub.s32 %s9, 1
    %s15 = ssub.s32 %s9, 2
    %s16 = sadd.s32 %s9, 1
    %s17 = ssub.s32 %s9, %s16
    %p18 = scmp.eq.s32.totalorder %s17, 0
    %s20 = sadd.s32 %s19, 1
    %s21 = scalar_select %p18, %s19, %s20
    %p24 = pneg %p18
    %p25 = scmp.eq.s32.totalorder %s9, 1
    %p26 = por %p24, %p25
    %p27 = scmp.ne.s32.totalorder %s19, %s22
    %p28 = scmp.eq.s32.totalorder %s9, 0
    %p29 = por %p27, %p28
    %p30 = scmp.ne.s32.totalorder %s19, %s22
    %p31 = scmp.eq.s32.totalorder %s14, 1
    %p32 = por %p30, %p31
    %p33 = scmp.ne.s32.totalorder %s22, %s23
    %p34 = scmp.eq.s32.totalorder %s14, 0
    %p35 = por %p33, %p34
    %p36 = scmp.ne.s32.totalorder %s22, %s23
    %p37 = scmp.eq.s32.totalorder %s15, 1
    %p38 = por %p36, %p37
    %p40 = scmp.ne.s32.totalorder %s23, %s39
    %p41 = scmp.eq.s32.totalorder %s15, 0
    %p42 = por %p40, %p41
    %s44 = sadd.s32 %s43, 1
    %p47 = scmp.eq.s32.totalorder %s9, 1
    %p48 = scmp.ne.s32.totalorder %s43, %s45
    %p49 = scmp.eq.s32.totalorder %s9, 0
    %p50 = por %p48, %p49
    %p51 = scmp.ne.s32.totalorder %s43, %s45
    %p52 = scmp.eq.s32.totalorder %s14, 1
    %p53 = por %p51, %p52
    %p54 = scmp.ne.s32.totalorder %s45, %s46
    %p55 = scmp.eq.s32.totalorder %s14, 0
    %p56 = por %p54, %p55
    %p57 = scmp.ne.s32.totalorder %s45, %s46
    %p58 = scmp.eq.s32.totalorder %s15, 1
    %p59 = por %p57, %p58
    %p61 = scmp.ne.s32.totalorder %s46, %s60
    %p62 = scmp.eq.s32.totalorder %s15, 0
    %p63 = por %p61, %p62
    %s65 = sadd.s32 %s64, 1
    %p68 = scmp.eq.s32.totalorder %s9, 1
    %p69 = scmp.ne.s32.totalorder %s64, %s66
    %p70 = scmp.eq.s32.totalorder %s9, 0
    %p71 = por %p69, %p70
    %p72 = scmp.ne.s32.totalorder %s64, %s66
    %p73 = scmp.eq.s32.totalorder %s14, 1
    %p74 = por %p72, %p73
    %p75 = scmp.ne.s32.totalorder %s66, %s67
    %p76 = scmp.eq.s32.totalorder %s14, 0
    %p77 = por %p75, %p76
    %p78 = scmp.ne.s32.totalorder %s66, %s67
    %p79 = scmp.eq.s32.totalorder %s15, 1
    %p80 = por %p78, %p79
    %p82 = scmp.ne.s32.totalorder %s67, %s81
    %p83 = scmp.eq.s32.totalorder %s15, 0
    %p84 = por %p82, %p83
    %s85 = ssub.s32 %s9, %s16
    %p86 = scmp.eq.s32.totalorder %s85, 0
    %s88 = sadd.s32 %s87, 1
    %s89 = scalar_select %p86, %s87, %s88
    %p92 = pneg %p86
    %p93 = scmp.eq.s32.totalorder %s9, 1
    %p94 = por %p92, %p93
    %p95 = scmp.ne.s32.totalorder %s87, %s90
    %p96 = scmp.eq.s32.totalorder %s9, 0
    %p97 = por %p95, %p96
    %p98 = scmp.ne.s32.totalorder %s87, %s90
    %p99 = scmp.eq.s32.totalorder %s14, 1
    %p100 = por %p98, %p99
    %p101 = scmp.ne.s32.totalorder %s90, %s91
    %p102 = scmp.eq.s32.totalorder %s14, 0
    %p103 = por %p101, %p102
    %p104 = scmp.ne.s32.totalorder %s90, %s91
    %p105 = scmp.eq.s32.totalorder %s15, 1
    %p106 = por %p104, %p105
    %p108 = scmp.ne.s32.totalorder %s91, %s107
    %p109 = scmp.eq.s32.totalorder %s15, 0
    %p110 = por %p108, %p109
    %p111 = scmp.le.s32.totalorder 1, %s9
    %p112 = scmp.lt.s32.totalorder %s9, 3
    %p113 = pnand %p111, %p112
    %p114 = pneg %p113
    // Predicated region
    $region9: #{bevfusion_forward.4} parent=5 // pred_check
      _
    $region10: #{bevfusion_forward.4} parent=5 // pred_check_branch
      %116 = sbr.rel (%p113) target = $region12
    $region11: #{bevfusion_forward.4} parent=5 // pred_region
      %s117 = ssub.s32 %s9, 1
      // Predicated region
      $region13: #{bevfusion_forward.4} parent=11 // pred_check
        %p118 = pneg %p56
      $region14: #{bevfusion_forward.4} parent=11 // pred_check_branch
        %120 = sbr.rel (%p118) target = $region16
      $region15: #{bevfusion_forward.4} parent=11 // pred_region
        _
      $region16: #{bevfusion_forward.4} parent=11 // pred_fallthru
        _
      // Predicated region
      $region17: #{bevfusion_forward.4} parent=11 // pred_check
        %p121 = pneg %p77
      $region18: #{bevfusion_forward.4} parent=11 // pred_check_branch
        %123 = sbr.rel (%p121) target = $region20
      $region19: #{bevfusion_forward.4} parent=11 // pred_region
        _
      $region20: #{bevfusion_forward.4} parent=11 // pred_fallthru
        _
    $region12: #{bevfusion_forward.4} parent=5 // pred_fallthru
      _
    %p124 = scmp.lt.s32.totalorder %s9, 2
    // Predicated region
    $region21: #{bevfusion_forward.4} parent=5 // pred_check
      %p125 = pneg %p124
    $region22: #{bevfusion_forward.4} parent=5 // pred_check_branch
      %127 = sbr.rel (%p125) target = $region24
    $region23: #{bevfusion_forward.4} parent=5 // pred_region
      // Predicated region
      $region25: #{bevfusion_forward.4} parent=23 // pred_check
        %p128 = pneg %p29
      $region26: #{bevfusion_forward.4} parent=23 // pred_check_branch
        %130 = sbr.rel (%p128) target = $region28
      $region27: #{bevfusion_forward.4} parent=23 // pred_region
        %s131 = smul.u32 16, %s9
        %p132 = scmp.lt.s32.totalorder %s131, 31
        %s133 = scalar_select %p132, %s131, 31
        %s134 = smul.addr %s133, 4
        %s135 = scalar_lea.vmem %s0, %s134
        %s136 = smul.u32 16, %s9
      $region28: #{bevfusion_forward.4} parent=23 // pred_fallthru
        _
    $region24: #{bevfusion_forward.4} parent=5 // pred_fallthru
      _
    %p137 = scmp.le.s32.totalorder 1, %s9
    %p138 = scmp.lt.s32.totalorder %s9, 3
    %p139 = pnand %p137, %p138
    %p140 = pneg %p139
    // Predicated region
    $region29: #{bevfusion_forward.4} parent=5 // pred_check
      _
    $region30: #{bevfusion_forward.4} parent=5 // pred_check_branch
      %142 = sbr.rel (%p139) target = $region32
    $region31: #{bevfusion_forward.4} parent=5 // pred_region
      %s143 = ssub.s32 %s9, 1
      %s144 = smul.u32 16, %s14
      %p145 = scmp.lt.s32.totalorder %s144, 31
      %s146 = scalar_select %p145, %s144, 31
      %s147 = smul.addr %s146, 4
      %s148 = scalar_lea.vmem %s0, %s147
      %p149 = pneg %p35
      %p150 = pneg %p32
      %p151 = pneg %p56
      %p152 = pneg %p53
      %p153 = pneg %p77
      %p154 = pneg %p74
      %p155 = pneg %p103
      %p156 = pneg %p100
      %s157 = smul.u32 16, %s14
      %p158 = scmp.lt.s32.totalorder %s157, 31
      %s159 = scalar_select %p158, %s157, 31
      %s160 = smul.addr %s159, 8
      %s161 = scalar_lea.vmem %s3, %s160
      %s162 = smul.u32 16, %s14
      %p163 = scmp.lt.s32.totalorder %s162, 31
      %s164 = scalar_select %p163, %s162, 31
      %s165 = smul.addr %s164, 4
      %s166 = scalar_lea.vmem %s0, %s165
      %s167 = smul.u32 16, %s14
      %s168 = smul.u32 16, %s14
      %p169 = scmp.lt.s32.totalorder %s168, 31
      %s170 = scalar_select %p169, %s168, 31
      %s171 = smul.addr %s170, 8
      %s172 = scalar_lea.vmem %s3, %s171
      %s173 = smul.u32 16, %s14
      %v175 = vld [vmem:[%s166] sm:$0xf]
      %v176 = vld [vmem:[%s166 + $0x4] sm:$0xf]
      %v177 = vld [vmem:[%s166 + $0x8] sm:$0xf]
      %v178 = vld [vmem:[%s166 + $0xc] sm:$0xf]
      %v179 = vld [vmem:[%s166 + $0x10] sm:$0xf]
      %v180 = vld [vmem:[%s166 + $0x14] sm:$0xf]
      %v181 = vld [vmem:[%s166 + $0x18] sm:$0xf]
      %v182 = vld [vmem:[%s166 + $0x1c] sm:$0xf]
      %v183 = vld [vmem:[%s166 + $0x20] sm:$0xf]
      %v184 = vld [vmem:[%s166 + $0x24] sm:$0xf]
      %v185 = vld [vmem:[%s166 + $0x28] sm:$0xf]
      %v186 = vld [vmem:[%s166 + $0x2c] sm:$0xf]
      %v187 = vld [vmem:[%s166 + $0x30] sm:$0xf]
      %v188 = vld [vmem:[%s166 + $0x34] sm:$0xf]
      %v189 = vld [vmem:[%s166 + $0x38] sm:$0xf]
      %v190 = vld [vmem:[%s166 + $0x3c] sm:$0xf]
      %v191 = vld [vmem:[%s1] sm:$0x3]
      %v192 = vld [vmem:[%s2] sm:$0x1]
      %v194 = vperm.slane %v192, 0
      %v212 = vunpack.c.l.b16 %v175
      %v213 = vunpack.c.l.b16 %v176
      %v214 = vunpack.c.l.b16 %v177
      %v215 = vunpack.c.l.b16 %v178
      %v216 = vunpack.c.l.b16 %v179
      %v217 = vunpack.c.l.b16 %v180
      %v218 = vunpack.c.l.b16 %v181
      %v219 = vunpack.c.l.b16 %v182
      %v220 = vunpack.c.l.b16 %v183
      %v221 = vunpack.c.l.b16 %v184
      %v222 = vunpack.c.l.b16 %v185
      %v223 = vunpack.c.l.b16 %v186
      %v224 = vunpack.c.l.b16 %v187
      %v225 = vunpack.c.l.b16 %v188
      %v226 = vunpack.c.l.b16 %v189
      %v227 = vunpack.c.l.b16 %v190
      %v228 = vpack.c.b16 %v213, %v212
      %v229 = vpack.c.b16 %v215, %v214
      %v230 = vpack.c.b16 %v217, %v216
      %v231 = vpack.c.b16 %v219, %v218
      %v232 = vpack.c.b16 %v221, %v220
      %v233 = vpack.c.b16 %v223, %v222
      %v234 = vpack.c.b16 %v225, %v224
      %v235 = vpack.c.b16 %v227, %v226
      %vm236 = vcmask 31744
      %v238 = vsel %vm236, %v228, 0
      %v241 = vsel %vm236, %v229, 0
      %v244 = vsel %vm236, %v230, 0
      %v247 = vsel %vm236, %v231, 0
      %v250 = vsel %vm236, %v232, 0
      %v253 = vsel %vm236, %v233, 0
      %v256 = vsel %vm236, %v234, 0
      %v259 = vsel %vm236, %v235, 0
      %vm261 = vcmask 1041408
      %v263 = vsel %vm261, %v191, 0
      %265 = vmatpush.bf16.msra.mxu0 0
      %266 = vmatpush.bf16.msra.mxu0 0
      %267 = vmatpush.bf16.msra.mxu0 0
      %268 = vmatpush.bf16.msra.mxu0 0
      %269 = vmatpush.bf16.msra.mxu0 0
      %270 = vmatpush.bf16.msra.mxu0 0
      %271 = vmatpush.bf16.msra.mxu0 0
      %272 = vmatpush.bf16.msra.mxu0 %v263
      %273 = vmatmul.bf16.gmra.mxu0 %v238
      %v274 = vpop.f32.mrf.mxu0
      %v275 = vadd.f32 %v194, %v274
      %v276 = vpop.f32.mrf.mxu0
      %v277 = vadd.f32 %v194, %v276
      %278 = vmatmul.bf16.gmra.mxu0 %v241
      %v279 = vpop.f32.mrf.mxu0
      %v280 = vadd.f32 %v194, %v279
      %v281 = vpop.f32.mrf.mxu0
      %v282 = vadd.f32 %v194, %v281
      %283 = vmatmul.bf16.gmra.mxu0 %v244
      %v284 = vpop.f32.mrf.mxu0
      %v285 = vadd.f32 %v194, %v284
      %v286 = vpop.f32.mrf.mxu0
      %v287 = vadd.f32 %v194, %v286
      %288 = vmatmul.bf16.gmra.mxu0 %v247
      %v289 = vpop.f32.mrf.mxu0
      %v290 = vadd.f32 %v194, %v289
      %v291 = vpop.f32.mrf.mxu0
      %v292 = vadd.f32 %v194, %v291
      %293 = vmatmul.bf16.gmra.mxu0 %v250
      %v294 = vpop.f32.mrf.mxu0
      %v295 = vadd.f32 %v194, %v294
      %v296 = vpop.f32.mrf.mxu0
      %v297 = vadd.f32 %v194, %v296
      %298 = vmatmul.bf16.gmra.mxu0 %v253
      %v299 = vpop.f32.mrf.mxu0
      %v300 = vadd.f32 %v194, %v299
      %v301 = vpop.f32.mrf.mxu0
      %v302 = vadd.f32 %v194, %v301
      %303 = vmatmul.bf16.gmra.mxu0 %v256
      %v304 = vpop.f32.mrf.mxu0
      %v305 = vadd.f32 %v194, %v304
      %v306 = vpop.f32.mrf.mxu0
      %v307 = vadd.f32 %v194, %v306
      %308 = vmatmul.bf16.gmra.mxu0 %v259
      %v309 = vpop.f32.mrf.mxu0
      %v310 = vadd.f32 %v194, %v309
      %v311 = vpop.f32.mrf.mxu0
      %v312 = vadd.f32 %v194, %v311
      %313 = vdwg.mxu0
      %v314 = vmax.f32 %v275, 0.0
      %v315 = vmax.f32 %v277, 0.0
      %v316 = vmax.f32 %v280, 0.0
      %v317 = vmax.f32 %v282, 0.0
      %v318 = vmax.f32 %v285, 0.0
      %v319 = vmax.f32 %v287, 0.0
      %v320 = vmax.f32 %v290, 0.0
      %v321 = vmax.f32 %v292, 0.0
      %v322 = vmax.f32 %v295, 0.0
      %v323 = vmax.f32 %v297, 0.0
      %v324 = vmax.f32 %v300, 0.0
      %v325 = vmax.f32 %v302, 0.0
      %v326 = vmax.f32 %v305, 0.0
      %v327 = vmax.f32 %v307, 0.0
      %v328 = vmax.f32 %v310, 0.0
      %v329 = vmax.f32 %v312, 0.0
      %vm330 = vcmask 130048
      %331 = vst.msk [vmem:[%s172] sm:$0xff] %vm330, %v314
      %332 = vst.msk [vmem:[%s172 + $0x8] sm:$0xff] %vm330, %v315
      %333 = vst.msk [vmem:[%s172 + $0x10] sm:$0xff] %vm330, %v316
      %334 = vst.msk [vmem:[%s172 + $0x18] sm:$0xff] %vm330, %v317
      %335 = vst.msk [vmem:[%s172 + $0x20] sm:$0xff] %vm330, %v318
      %336 = vst.msk [vmem:[%s172 + $0x28] sm:$0xff] %vm330, %v319
      %337 = vst.msk [vmem:[%s172 + $0x30] sm:$0xff] %vm330, %v320
      %338 = vst.msk [vmem:[%s172 + $0x38] sm:$0xff] %vm330, %v321
      %339 = vst.msk [vmem:[%s172 + $0x40] sm:$0xff] %vm330, %v322
      %340 = vst.msk [vmem:[%s172 + $0x48] sm:$0xff] %vm330, %v323
      %341 = vst.msk [vmem:[%s172 + $0x50] sm:$0xff] %vm330, %v324
      %342 = vst.msk [vmem:[%s172 + $0x58] sm:$0xff] %vm330, %v325
      %343 = vst.msk [vmem:[%s172 + $0x60] sm:$0xff] %vm330, %v326
      %344 = vst.msk [vmem:[%s172 + $0x68] sm:$0xff] %vm330, %v327
      %345 = vst.msk [vmem:[%s172 + $0x70] sm:$0xff] %vm330, %v328
      %346 = vst.msk [vmem:[%s172 + $0x78] sm:$0xff] %vm330, %v329
      %s347 = smul.u32 16, %s14
      %p348 = scmp.lt.s32.totalorder %s347, 31
      %s349 = scalar_select %p348, %s347, 31
      %s350 = smul.addr %s349, 8
      %s351 = scalar_lea.vmem %s3, %s350
      // Predicated region
      $region33: #{bevfusion_forward.4} parent=31 // pred_check
        %p352 = pneg %p100
      $region34: #{bevfusion_forward.4} parent=31 // pred_check_branch
        %354 = sbr.rel (%p352) target = $region36
      $region35: #{bevfusion_forward.4} parent=31 // pred_region
        %s355 = smul.u32 16, %s14
      $region36: #{bevfusion_forward.4} parent=31 // pred_fallthru
        _
    $region32: #{bevfusion_forward.4} parent=5 // pred_fallthru
      _
    %p356 = scmp.le.s32.totalorder 2, %s9
    // Predicated region
    $region37: #{bevfusion_forward.4} parent=5 // pred_check
      %p357 = pneg %p356
    $region38: #{bevfusion_forward.4} parent=5 // pred_check_branch
      %359 = sbr.rel (%p357) target = $region40
    $region39: #{bevfusion_forward.4} parent=5 // pred_region
      %s360 = ssub.s32 %s9, 2
      // Predicated region
      $region41: #{bevfusion_forward.4} parent=39 // pred_check
        %p361 = pneg %p106
      $region42: #{bevfusion_forward.4} parent=39 // pred_check_branch
        %363 = sbr.rel (%p361) target = $region44
      $region43: #{bevfusion_forward.4} parent=39 // pred_region
        %s364 = smul.u32 16, %s15
        %p365 = scmp.lt.s32.totalorder %s364, 31
        %s366 = scalar_select %p365, %s364, 31
        %s367 = smul.addr %s366, 8
        %s368 = scalar_lea.vmem %s3, %s367
      $region44: #{bevfusion_forward.4} parent=39 // pred_fallthru
        _
    $region40: #{bevfusion_forward.4} parent=5 // pred_fallthru
      _
  $region6: #{bevfusion_forward.4} parent=0 // loop_footer
    %s13 = sadd.s32 1, %s9
  $region7: #{bevfusion_forward.4} parent=0 // loop_footer_branch
    %8 = sbr.rel target = $region3
  $region8: #{bevfusion_forward.4} parent=0 // loop_exit
    _

// kernel: bevfusion_forward.3
$region0: #{bevfusion_forward.3}
  #allocation0 [shape = 'u32[]', space=smem, size = 0x4, offset = 0x4, fixed_abs, tag = 'smem constant byte address 0x4 - core index']
  #allocation1 [shape = 'u32[72,128]{1,0:T(1,128)}', space=vmem, size = 0x9000, scoped, tag = 'internal scratch']
  #allocation2 [shape = 'f32[32,16]{1,0:T(8,128)}', space=vmem, size = 0x4000, scoped, tag = 'scratch operand']
  %s0 = inlined_call_operand.vmem [shape: bf16[2,512,12], index: 0, kind: input, shape index: {}]
  %s1 = inlined_call_operand.vmem [shape: bf16[12,32], index: 1, kind: input, shape index: {}]
  %s2 = inlined_call_operand.vmem [shape: f32[1,32], index: 2, kind: input, shape index: {}]
  %s3 = inlined_call_operand.vmem [shape: bf16[32,24], index: 3, kind: input, shape index: {}]
  %s4 = inlined_call_operand.vmem [shape: f32[1,24], index: 4, kind: input, shape index: {}]
  %s5 = inlined_call_operand.vmem [shape: f32[1,8], index: 5, kind: input, shape index: {}]
  %s6 = inlined_call_operand.vmem [shape: bf16[16,16], index: 6, kind: input, shape index: {}]
  %s7 = inlined_call_operand.vmem [shape: f32[1,16], index: 7, kind: input, shape index: {}]
  %s8 = inlined_call_operand.vmem [shape: bf16[2,64,16], index: 8, kind: output, shape index: {}]
  %s9 = sld [smem:[#allocation0]]
  $region73: #{bevfusion_forward.3} parent=0
    _
  %s11 = ssub.s32 1, %s9
  %s12 = scalar_select 0, %s11, %s9
  loop: start=0, step=1, limit=34
  $region2: #{bevfusion_forward.3} parent=0 // loop_pre_header
    _
  $region3: #{bevfusion_forward.3} parent=0 // loop_header
    %s14 = sphi 0, %s18
    %p15 = scmp.ge.s32.totalorder %s14, 34
    %s21 = sphi 0, %s40
    %s22 = sphi 0, %s36
    %s23 = sphi 0, %s32
    %s24 = sphi 0, %s21
    %s25 = sphi 0, %s22
    %s26 = sphi 0, %s23
    %s27 = sphi 0, %s24
    %s28 = sphi 0, %s25
    %s29 = sphi 0, %s26
    %s49 = sphi 0, %s51
    %s52 = sphi 0, %s49
    %s53 = sphi 0, %s52
    %s69 = sphi 0, %s53
    %s73 = sphi 0, %s73
    %s75 = sphi 0, %s73
    %s76 = sphi 0, %s75
    %s90 = sphi 0, %s76
    %s94 = sphi 0, %s94
    %s96 = sphi 0, %s94
    %s97 = sphi 0, %s96
    %s111 = sphi 0, %s97
    %s115 = sphi 0, %s115
    %s117 = sphi 0, %s115
    %s118 = sphi 0, %s117
    %s132 = sphi 0, %s118
    %s136 = sphi 0, %s136
    %s138 = sphi 0, %s136
    %s139 = sphi 0, %s138
    %s153 = sphi 0, %s139
    %s157 = sphi 0, %s157
    %s159 = sphi 0, %s157
    %s160 = sphi 0, %s159
    %s174 = sphi 0, %s160
    %s178 = sphi 0, %s178
    %s180 = sphi 0, %s178
    %s181 = sphi 0, %s180
    %s195 = sphi 0, %s181
    %s199 = sphi 0, %s199
    %s201 = sphi 0, %s199
    %s202 = sphi 0, %s201
    %s216 = sphi 0, %s202
    %s224 = sphi 0, %s226
    %s227 = sphi 0, %s224
    %s228 = sphi 0, %s227
    %s244 = sphi 0, %s228
  $region4: #{bevfusion_forward.3} parent=0 // loop_header_branch
    %17 = sbr.rel (%p15) target = $region8
  $region5: #{bevfusion_forward.3} parent=0 // loop_body
    %s19 = ssub.s32 %s14, 1
    %s20 = ssub.s32 %s14, 2
    %s30 = sadd.s32 1, %s23
    %p31 = scmp.ge.s32.totalorder %s30, 8
    %s32 = scalar_select %p31, 0, %s30
    %s33 = sadd.s32 1, %s22
    %s34 = scalar_select %p31, %s33, %s22
    %p35 = scmp.ge.s32.totalorder %s34, 2
    %s36 = scalar_select %p35, 0, %s34
    %s37 = sadd.s32 1, %s21
    %s38 = scalar_select %p35, %s37, %s21
    %p39 = scmp.ge.s32.totalorder %s38, 2
    %s40 = scalar_select %p39, 0, %s38
    %s41 = smul.u32 %s23, 2
    %s42 = sadd.s32 %s41, %s22
    %s43 = smul.u32 %s32, 2
    %s44 = sadd.s32 %s43, %s36
    %s45 = ssub.s32 %s21, %s40
    %s46 = ssub.s32 %s42, %s44
    %s47 = sor.u32 %s45, %s46
    %p48 = scmp.eq.s32.totalorder %s47, 0
    %s50 = sadd.s32 %s49, 1
    %s51 = scalar_select %p48, %s49, %s50
    %p54 = pneg %p48
    %p55 = scmp.eq.s32.totalorder %s14, 31
    %p56 = por %p54, %p55
    %p57 = scmp.ne.s32.totalorder %s49, %s52
    %p58 = scmp.eq.s32.totalorder %s14, 0
    %p59 = por %p57, %p58
    %p60 = scmp.ne.s32.totalorder %s49, %s52
    %p61 = scmp.eq.s32.totalorder %s19, 31
    %p62 = por %p60, %p61
    %p63 = scmp.ne.s32.totalorder %s52, %s53
    %p64 = scmp.eq.s32.totalorder %s19, 0
    %p65 = por %p63, %p64
    %p66 = scmp.ne.s32.totalorder %s52, %s53
    %p67 = scmp.eq.s32.totalorder %s20, 31
    %p68 = por %p66, %p67
    %p70 = scmp.ne.s32.totalorder %s53, %s69
    %p71 = scmp.eq.s32.totalorder %s20, 0
    %p72 = por %p70, %p71
    %s74 = sadd.s32 %s73, 1
    %p77 = scmp.eq.s32.totalorder %s14, 31
    %p78 = scmp.ne.s32.totalorder %s73, %s75
    %p79 = scmp.eq.s32.totalorder %s14, 0
    %p80 = por %p78, %p79
    %p81 = scmp.ne.s32.totalorder %s73, %s75
    %p82 = scmp.eq.s32.totalorder %s19, 31
    %p83 = por %p81, %p82
    %p84 = scmp.ne.s32.totalorder %s75, %s76
    %p85 = scmp.eq.s32.totalorder %s19, 0
    %p86 = por %p84, %p85
    %p87 = scmp.ne.s32.totalorder %s75, %s76
    %p88 = scmp.eq.s32.totalorder %s20, 31
    %p89 = por %p87, %p88
    %p91 = scmp.ne.s32.totalorder %s76, %s90
    %p92 = scmp.eq.s32.totalorder %s20, 0
    %p93 = por %p91, %p92
    %s95 = sadd.s32 %s94, 1
    %p98 = scmp.eq.s32.totalorder %s14, 31
    %p99 = scmp.ne.s32.totalorder %s94, %s96
    %p100 = scmp.eq.s32.totalorder %s14, 0
    %p101 = por %p99, %p100
    %p102 = scmp.ne.s32.totalorder %s94, %s96
    %p103 = scmp.eq.s32.totalorder %s19, 31
    %p104 = por %p102, %p103
    %p105 = scmp.ne.s32.totalorder %s96, %s97
    %p106 = scmp.eq.s32.totalorder %s19, 0
    %p107 = por %p105, %p106
    %p108 = scmp.ne.s32.totalorder %s96, %s97
    %p109 = scmp.eq.s32.totalorder %s20, 31
    %p110 = por %p108, %p109
    %p112 = scmp.ne.s32.totalorder %s97, %s111
    %p113 = scmp.eq.s32.totalorder %s20, 0
    %p114 = por %p112, %p113
    %s116 = sadd.s32 %s115, 1
    %p119 = scmp.eq.s32.totalorder %s14, 31
    %p120 = scmp.ne.s32.totalorder %s115, %s117
    %p121 = scmp.eq.s32.totalorder %s14, 0
    %p122 = por %p120, %p121
    %p123 = scmp.ne.s32.totalorder %s115, %s117
    %p124 = scmp.eq.s32.totalorder %s19, 31
    %p125 = por %p123, %p124
    %p126 = scmp.ne.s32.totalorder %s117, %s118
    %p127 = scmp.eq.s32.totalorder %s19, 0
    %p128 = por %p126, %p127
    %p129 = scmp.ne.s32.totalorder %s117, %s118
    %p130 = scmp.eq.s32.totalorder %s20, 31
    %p131 = por %p129, %p130
    %p133 = scmp.ne.s32.totalorder %s118, %s132
    %p134 = scmp.eq.s32.totalorder %s20, 0
    %p135 = por %p133, %p134
    %s137 = sadd.s32 %s136, 1
    %p140 = scmp.eq.s32.totalorder %s14, 31
    %p141 = scmp.ne.s32.totalorder %s136, %s138
    %p142 = scmp.eq.s32.totalorder %s14, 0
    %p143 = por %p141, %p142
    %p144 = scmp.ne.s32.totalorder %s136, %s138
    %p145 = scmp.eq.s32.totalorder %s19, 31
    %p146 = por %p144, %p145
    %p147 = scmp.ne.s32.totalorder %s138, %s139
    %p148 = scmp.eq.s32.totalorder %s19, 0
    %p149 = por %p147, %p148
    %p150 = scmp.ne.s32.totalorder %s138, %s139
    %p151 = scmp.eq.s32.totalorder %s20, 31
    %p152 = por %p150, %p151
    %p154 = scmp.ne.s32.totalorder %s139, %s153
    %p155 = scmp.eq.s32.totalorder %s20, 0
    %p156 = por %p154, %p155
    %s158 = sadd.s32 %s157, 1
    %p161 = scmp.eq.s32.totalorder %s14, 31
    %p162 = scmp.ne.s32.totalorder %s157, %s159
    %p163 = scmp.eq.s32.totalorder %s14, 0
    %p164 = por %p162, %p163
    %p165 = scmp.ne.s32.totalorder %s157, %s159
    %p166 = scmp.eq.s32.totalorder %s19, 31
    %p167 = por %p165, %p166
    %p168 = scmp.ne.s32.totalorder %s159, %s160
    %p169 = scmp.eq.s32.totalorder %s19, 0
    %p170 = por %p168, %p169
    %p171 = scmp.ne.s32.totalorder %s159, %s160
    %p172 = scmp.eq.s32.totalorder %s20, 31
    %p173 = por %p171, %p172
    %p175 = scmp.ne.s32.totalorder %s160, %s174
    %p176 = scmp.eq.s32.totalorder %s20, 0
    %p177 = por %p175, %p176
    %s179 = sadd.s32 %s178, 1
    %p182 = scmp.eq.s32.totalorder %s14, 31
    %p183 = scmp.ne.s32.totalorder %s178, %s180
    %p184 = scmp.eq.s32.totalorder %s14, 0
    %p185 = por %p183, %p184
    %p186 = scmp.ne.s32.totalorder %s178, %s180
    %p187 = scmp.eq.s32.totalorder %s19, 31
    %p188 = por %p186, %p187
    %p189 = scmp.ne.s32.totalorder %s180, %s181
    %p190 = scmp.eq.s32.totalorder %s19, 0
    %p191 = por %p189, %p190
    %p192 = scmp.ne.s32.totalorder %s180, %s181
    %p193 = scmp.eq.s32.totalorder %s20, 31
    %p194 = por %p192, %p193
    %p196 = scmp.ne.s32.totalorder %s181, %s195
    %p197 = scmp.eq.s32.totalorder %s20, 0
    %p198 = por %p196, %p197
    %s200 = sadd.s32 %s199, 1
    %p203 = scmp.eq.s32.totalorder %s14, 31
    %p204 = scmp.ne.s32.totalorder %s199, %s201
    %p205 = scmp.eq.s32.totalorder %s14, 0
    %p206 = por %p204, %p205
    %p207 = scmp.ne.s32.totalorder %s199, %s201
    %p208 = scmp.eq.s32.totalorder %s19, 31
    %p209 = por %p207, %p208
    %p210 = scmp.ne.s32.totalorder %s201, %s202
    %p211 = scmp.eq.s32.totalorder %s19, 0
    %p212 = por %p210, %p211
    %p213 = scmp.ne.s32.totalorder %s201, %s202
    %p214 = scmp.eq.s32.totalorder %s20, 31
    %p215 = por %p213, %p214
    %p217 = scmp.ne.s32.totalorder %s202, %s216
    %p218 = scmp.eq.s32.totalorder %s20, 0
    %p219 = por %p217, %p218
    %s220 = ssub.s32 %s21, %s40
    %s221 = ssub.s32 %s22, %s36
    %s222 = sor.u32 %s220, %s221
    %p223 = scmp.eq.s32.totalorder %s222, 0
    %s225 = sadd.s32 %s224, 1
    %s226 = scalar_select %p223, %s224, %s225
    %p229 = pneg %p223
    %p230 = scmp.eq.s32.totalorder %s14, 31
    %p231 = por %p229, %p230
    %p232 = scmp.ne.s32.totalorder %s224, %s227
    %p233 = scmp.eq.s32.totalorder %s14, 0
    %p234 = por %p232, %p233
    %p235 = scmp.ne.s32.totalorder %s224, %s227
    %p236 = scmp.eq.s32.totalorder %s19, 31
    %p237 = por %p235, %p236
    %p238 = scmp.ne.s32.totalorder %s227, %s228
    %p239 = scmp.eq.s32.totalorder %s19, 0
    %p240 = por %p238, %p239
    %p241 = scmp.ne.s32.totalorder %s227, %s228
    %p242 = scmp.eq.s32.totalorder %s20, 31
    %p243 = por %p241, %p242
    %p245 = scmp.ne.s32.totalorder %s228, %s244
    %p246 = scmp.eq.s32.totalorder %s20, 0
    %p247 = por %p245, %p246
    %p248 = scmp.le.s32.totalorder 1, %s14
    %p249 = scmp.lt.s32.totalorder %s14, 33
    %p250 = pnand %p248, %p249
    %p251 = pneg %p250
    // Predicated region
    $region9: #{bevfusion_forward.3} parent=5 // pred_check
      _
    $region10: #{bevfusion_forward.3} parent=5 // pred_check_branch
      %253 = sbr.rel (%p250) target = $region12
    $region11: #{bevfusion_forward.3} parent=5 // pred_region
      %s254 = ssub.s32 %s14, 1
      // Predicated region
      $region13: #{bevfusion_forward.3} parent=11 // pred_check
        %p255 = pneg %p86
      $region14: #{bevfusion_forward.3} parent=11 // pred_check_branch
        %257 = sbr.rel (%p255) target = $region16
      $region15: #{bevfusion_forward.3} parent=11 // pred_region
        _
      $region16: #{bevfusion_forward.3} parent=11 // pred_fallthru
        _
      // Predicated region
      $region17: #{bevfusion_forward.3} parent=11 // pred_check
        %p258 = pneg %p107
      $region18: #{bevfusion_forward.3} parent=11 // pred_check_branch
        %260 = sbr.rel (%p258) target = $region20
      $region19: #{bevfusion_forward.3} parent=11 // pred_region
        _
      $region20: #{bevfusion_forward.3} parent=11 // pred_fallthru
        _
      // Predicated region
      $region21: #{bevfusion_forward.3} parent=11 // pred_check
        %p261 = pneg %p128
      $region22: #{bevfusion_forward.3} parent=11 // pred_check_branch
        %263 = sbr.rel (%p261) target = $region24
      $region23: #{bevfusion_forward.3} parent=11 // pred_region
        _
      $region24: #{bevfusion_forward.3} parent=11 // pred_fallthru
        _
      // Predicated region
      $region25: #{bevfusion_forward.3} parent=11 // pred_check
        %p264 = pneg %p149
      $region26: #{bevfusion_forward.3} parent=11 // pred_check_branch
        %266 = sbr.rel (%p264) target = $region28
      $region27: #{bevfusion_forward.3} parent=11 // pred_region
        _
      $region28: #{bevfusion_forward.3} parent=11 // pred_fallthru
        _
      // Predicated region
      $region29: #{bevfusion_forward.3} parent=11 // pred_check
        %p267 = pneg %p170
      $region30: #{bevfusion_forward.3} parent=11 // pred_check_branch
        %269 = sbr.rel (%p267) target = $region32
      $region31: #{bevfusion_forward.3} parent=11 // pred_region
        _
      $region32: #{bevfusion_forward.3} parent=11 // pred_fallthru
        _
      // Predicated region
      $region33: #{bevfusion_forward.3} parent=11 // pred_check
        %p270 = pneg %p191
      $region34: #{bevfusion_forward.3} parent=11 // pred_check_branch
        %272 = sbr.rel (%p270) target = $region36
      $region35: #{bevfusion_forward.3} parent=11 // pred_region
        _
      $region36: #{bevfusion_forward.3} parent=11 // pred_fallthru
        _
      // Predicated region
      $region37: #{bevfusion_forward.3} parent=11 // pred_check
        %p273 = pneg %p212
      $region38: #{bevfusion_forward.3} parent=11 // pred_check_branch
        %275 = sbr.rel (%p273) target = $region40
      $region39: #{bevfusion_forward.3} parent=11 // pred_region
        _
      $region40: #{bevfusion_forward.3} parent=11 // pred_fallthru
        _
    $region12: #{bevfusion_forward.3} parent=5 // pred_fallthru
      _
    %p276 = scmp.lt.s32.totalorder %s14, 32
    // Predicated region
    $region41: #{bevfusion_forward.3} parent=5 // pred_check
      %p277 = pneg %p276
    $region42: #{bevfusion_forward.3} parent=5 // pred_check_branch
      %279 = sbr.rel (%p277) target = $region44
    $region43: #{bevfusion_forward.3} parent=5 // pred_region
      // Predicated region
      $region45: #{bevfusion_forward.3} parent=43 // pred_check
        %p280 = pneg %p59
      $region46: #{bevfusion_forward.3} parent=43 // pred_check_branch
        %282 = sbr.rel (%p280) target = $region48
      $region47: #{bevfusion_forward.3} parent=43 // pred_region
        %s283 = smul.u32 %s23, 2
        %s284 = sadd.s32 %s283, %s22
        %s285 = smul.u32 4, %s284
        %p286 = scmp.lt.s32.totalorder %s21, 1
        %s287 = scalar_select %p286, %s21, 1
        %p288 = scmp.lt.s32.totalorder %s285, 63
        %s289 = scalar_select %p288, %s285, 63
        %s290 = smul.addr %s287, 64
        %s291 = sadd.s32 %s289, %s290
        %s292 = smul.addr %s291, 4
        %s293 = scalar_lea.vmem %s0, %s292
        %s294 = smul.u32 %s23, 2
        %s295 = sadd.s32 %s294, %s22
        %s296 = smul.u32 4, %s295
      $region48: #{bevfusion_forward.3} parent=43 // pred_fallthru
        _
    $region44: #{bevfusion_forward.3} parent=5 // pred_fallthru
      _
    %p297 = scmp.le.s32.totalorder 1, %s14
    %p298 = scmp.lt.s32.totalorder %s14, 33
    %p299 = pnand %p297, %p298
    %p300 = pneg %p299
    // Predicated region
    $region49: #{bevfusion_forward.3} parent=5 // pred_check
      _
    $region50: #{bevfusion_forward.3} parent=5 // pred_check_branch
      %302 = sbr.rel (%p299) target = $region52
    $region51: #{bevfusion_forward.3} parent=5 // pred_region
      %s303 = ssub.s32 %s14, 1
      %s304 = smul.u32 %s26, 2
      %s305 = sadd.s32 %s304, %s25
      %s306 = smul.u32 4, %s305
      %p307 = scmp.lt.s32.totalorder %s24, 1
      %s308 = scalar_select %p307, %s24, 1
      %p309 = scmp.lt.s32.totalorder %s306, 63
      %s310 = scalar_select %p309, %s306, 63
      %s311 = smul.addr %s308, 64
      %s312 = sadd.s32 %s310, %s311
      %s313 = smul.addr %s312, 4
      %s314 = scalar_lea.vmem %s0, %s313
      %p315 = pneg %p65
      %p316 = pneg %p62
      %p317 = pneg %p86
      %p318 = pneg %p83
      %p319 = pneg %p107
      %p320 = pneg %p104
      %p321 = pneg %p128
      %p322 = pneg %p125
      %p323 = pneg %p149
      %p324 = pneg %p146
      %p325 = pneg %p170
      %p326 = pneg %p167
      %p327 = pneg %p191
      %p328 = pneg %p188
      %p329 = pneg %p212
      %p330 = pneg %p209
      %p331 = pneg %p240
      %p332 = pneg %p237
      %s333 = smul.u32 4, %s25
      %p334 = scmp.lt.s32.totalorder %s24, 1
      %s335 = scalar_select %p334, %s24, 1
      %p336 = scmp.lt.s32.totalorder %s333, 7
      %s337 = scalar_select %p336, %s333, 7
      %s338 = smul.addr %s335, 8
      %s339 = sadd.s32 %s337, %s338
      %s340 = smul.addr %s339, 4
      %s341 = scalar_lea.vmem %s8, %s340
      %s342 = smul.u32 %s26, 2
      %s343 = sadd.s32 %s342, %s25
      %s344 = smul.u32 4, %s343
      %p345 = scmp.lt.s32.totalorder %s24, 1
      %s346 = scalar_select %p345, %s24, 1
      %p347 = scmp.lt.s32.totalorder %s344, 63
      %s348 = scalar_select %p347, %s344, 63
      %s349 = smul.addr %s346, 64
      %s350 = sadd.s32 %s348, %s349
      %s351 = smul.addr %s350, 4
      %s352 = scalar_lea.vmem %s0, %s351
      %s353 = smul.u32 %s26, 2
      %s354 = sadd.s32 %s353, %s25
      %s355 = smul.u32 4, %s354
      %s356 = smul.u32 4, %s25
      %p357 = scmp.lt.s32.totalorder %s24, 1
      %s358 = scalar_select %p357, %s24, 1
      %p359 = scmp.lt.s32.totalorder %s356, 7
      %s360 = scalar_select %p359, %s356, 7
      %s361 = smul.addr %s358, 8
      %s362 = sadd.s32 %s360, %s361
      %s363 = smul.addr %s362, 4
      %s364 = scalar_lea.vmem %s8, %s363
      %s365 = smul.u32 4, %s25
      %v367 = vld [vmem:[%s352] sm:$0xf]
      %v368 = vld [vmem:[%s352 + $0x4] sm:$0xf]
      %v369 = vld [vmem:[%s352 + $0x8] sm:$0xf]
      %v370 = vld [vmem:[%s352 + $0xc] sm:$0xf]
      %v371 = vld [vmem:[%s1] sm:$0xf]
      %v372 = vld [vmem:[%s1 + $0x4] sm:$0x3]
      %v373 = vld [vmem:[%s2] sm:$0x1]
      %v375 = vperm.slane %v373, 0
      %v381 = vunpack.c.l.b16 %v367
      %v382 = vunpack.c.l.b16 %v368
      %v383 = vunpack.c.l.b16 %v369
      %v384 = vunpack.c.l.b16 %v370
      %v385 = vpack.c.b16 %v382, %v381
      %v386 = vpack.c.b16 %v384, %v383
      %v389 = vunpack.c.l.b16 %v371
      %v390 = vunpack.c.l.b16 %v372
      %v391 = vpack.c.b16 %v390, %v389
      %vm392 = vcmask 97280
      %v394 = vsel %vm392, %v385, 0
      %v397 = vsel %vm392, %v386, 0
      %vm399 = vcmask 1045504
      %v401 = vsel %vm399, %v391, 0
      %403 = vmatpush.bf16.msra.mxu0 0
      %404 = vmatpush.bf16.msra.mxu0 0
      %405 = vmatpush.bf16.msra.mxu0 0
      %406 = vmatpush.bf16.msra.mxu0 0
      %407 = vmatpush.bf16.msra.mxu0 0
      %408 = vmatpush.bf16.msra.mxu0 0
      %409 = vmatpush.bf16.msra.mxu0 0
      %410 = vmatpush.bf16.msra.mxu0 %v401
      %411 = vmatmul.bf16.gmra.mxu0 %v394
      %v412 = vpop.f32.mrf.mxu0
      %v413 = vadd.f32 %v375, %v412
      %v414 = vpop.f32.mrf.mxu0
      %v415 = vadd.f32 %v375, %v414
      %416 = vmatmul.bf16.gmra.mxu0 %v397
      %v417 = vpop.f32.mrf.mxu0
      %v418 = vadd.f32 %v375, %v417
      %v419 = vpop.f32.mrf.mxu0
      %v420 = vadd.f32 %v375, %v419
      %421 = vdwg.mxu0
      %v422 = vmax.f32 %v413, 0.0
      %v423 = vmax.f32 %v415, 0.0
      %v424 = vmax.f32 %v418, 0.0
      %v425 = vmax.f32 %v420, 0.0
      %v426 = vpack.c.bf16 %v423, %v422
      %v427 = vpack.c.bf16 %v425, %v424
      %v428 = vld [vmem:[%s3] sm:$0xf]
      %v429 = vld [vmem:[%s3 + $0x4] sm:$0xf]
      %v430 = vld [vmem:[%s3 + $0x8] sm:$0xf]
      %v431 = vld [vmem:[%s3 + $0xc] sm:$0xf]
      %v432 = vld [vmem:[%s4] sm:$0x1]
      %v434 = vperm.slane %v432, 0
      %v440 = vunpack.c.l.b16 %v428
      %v441 = vunpack.c.l.b16 %v429
      %v442 = vunpack.c.l.b16 %v430
      %v443 = vunpack.c.l.b16 %v431
      %v444 = vpack.c.b16 %v441, %v440
      %v445 = vpack.c.b16 %v443, %v442
      %vm448 = vcmask 261120
      %v450 = vsel %vm448, %v426, 0
      %v453 = vsel %vm448, %v427, 0
      %455 = vmatpush.bf16.msra.mxu0 0
      %456 = vmatpush.bf16.msra.mxu0 0
      %457 = vmatpush.bf16.msra.mxu0 0
      %458 = vmatpush.bf16.msra.mxu0 0
      %459 = vmatpush.bf16.msra.mxu0 0
      %460 = vmatpush.bf16.msra.mxu0 0
      %461 = vmatpush.bf16.msra.mxu0 %v445
      %462 = vmatpush.bf16.msra.mxu0 %v444
      %463 = vmatmul.bf16.gmra.mxu0 %v450
      %v464 = vpop.f32.mrf.mxu0
      %v465 = vadd.f32 %v434, %v464
      %v466 = vpop.f32.mrf.mxu0
      %v467 = vadd.f32 %v434, %v466
      %468 = vmatmul.bf16.gmra.mxu0 %v453
      %v469 = vpop.f32.mrf.mxu0
      %v470 = vadd.f32 %v434, %v469
      %v471 = vpop.f32.mrf.mxu0
      %v472 = vadd.f32 %v434, %v471
      %473 = vdwg.mxu0
      %vm474 = vcmask 64512
      %v475 = vsel %vm474, %v465, -inf
      %476 = vmax.xlane.f32.xlu0 %v475
      %v477 = vpop.xlane.xlu0 %476
      %v478 = vsel %vm474, %v467, -inf
      %479 = vmax.xlane.f32.xlu0 %v478
      %v480 = vpop.xlane.xlu0 %479
      %v481 = vsel %vm474, %v470, -inf
      %482 = vmax.xlane.f32.xlu0 %v481
      %v483 = vpop.xlane.xlu0 %482
      %v484 = vsel %vm474, %v472, -inf
      %485 = vmax.xlane.f32.xlu0 %v484
      %v486 = vpop.xlane.xlu0 %485
      %v487 = vsub.f32 %v465, %v477
      %v488 = vsub.f32 %v467, %v480
      %v489 = vsub.f32 %v470, %v483
      %v490 = vsub.f32 %v472, %v486
      %v491 = vmul.f32 %v487, 1.442695
      %v492 = vpow.pop %v491
      %v493 = vmul.f32 %v488, 1.442695
      %v494 = vpow.pop %v493
      %v495 = vmul.f32 %v489, 1.442695
      %v496 = vpow.pop %v495
      %v497 = vmul.f32 %v490, 1.442695
      %v498 = vpow.pop %v497
      %v499 = vsel %vm474, %v492, 0.0
      %500 = vadd.xlane.f32.xlu0 %v499
      %v501 = vpop.xlane.xlu0 %500
      %v502 = vsel %vm474, %v494, 0.0
      %503 = vadd.xlane.f32.xlu0 %v502
      %v504 = vpop.xlane.xlu0 %503
      %v505 = vsel %vm474, %v496, 0.0
      %506 = vadd.xlane.f32.xlu0 %v505
      %v507 = vpop.xlane.xlu0 %506
      %v508 = vsel %vm474, %v498, 0.0
      %509 = vadd.xlane.f32.xlu0 %v508
      %v510 = vpop.xlane.xlu0 %509
      %v511 = vld [vmem:[%s5] sm:$0x1]
      %v513 = vperm.slane %v511, 0
      %v515 = vmul.f32 %v492, %v513
      %v516 = vmul.f32 %v494, %v513
      %v517 = vmul.f32 %v496, %v513
      %v518 = vmul.f32 %v498, %v513
      %v519 = vsel %vm474, %v515, 0.0
      %520 = vadd.xlane.f32.xlu0 %v519
      %v521 = vpop.xlane.xlu0 %520
      %v522 = vsel %vm474, %v516, 0.0
      %523 = vadd.xlane.f32.xlu0 %v522
      %v524 = vpop.xlane.xlu0 %523
      %v525 = vsel %vm474, %v517, 0.0
      %526 = vadd.xlane.f32.xlu0 %v525
      %v527 = vpop.xlane.xlu0 %526
      %v528 = vsel %vm474, %v518, 0.0
      %529 = vadd.xlane.f32.xlu0 %v528
      %v530 = vpop.xlane.xlu0 %529
      %v531 = vrcp.pop %v501
      %v532 = vrcp.pop %v504
      %v533 = vrcp.pop %v507
      %v534 = vrcp.pop %v510
      %v535 = vmul.f32 %v521, %v531
      %v536 = vmul.f32 %v524, %v532
      %v537 = vmul.f32 %v527, %v533
      %v538 = vmul.f32 %v530, %v534
      %p539 = scmp.eq.s32.totalorder %s26, 0
      // Predicated region
      $region53: #{bevfusion_forward.3} parent=51 // pred_check
        %p540 = pneg %p539
      $region54: #{bevfusion_forward.3} parent=51 // pred_check_branch
        %542 = sbr.rel (%p540) target = $region56
      $region55: #{bevfusion_forward.3} parent=51 // pred_region
        %vm543 = vcmask 130048
        %544 = vst.msk [vmem:[#allocation2] sm:$0xff] %vm543, 0.0
        %545 = vst.msk [vmem:[#allocation2 + $0x8] sm:$0xff] %vm543, 0.0
        %546 = vst.msk [vmem:[#allocation2 + $0x10] sm:$0xff] %vm543, 0.0
        %547 = vst.msk [vmem:[#allocation2 + $0x18] sm:$0xff] %vm543, 0.0
      $region56: #{bevfusion_forward.3} parent=51 // pred_fallthru
        _
      %v548 = vld [vmem:[#allocation2] sm:$0xff]
      %v549 = vld [vmem:[#allocation2 + $0x8] sm:$0xff]
      %v550 = vld [vmem:[#allocation2 + $0x10] sm:$0xff]
      %v551 = vld [vmem:[#allocation2 + $0x18] sm:$0xff]
      %v552 = vmul.f32 %v535, %v465
      %v553 = vmul.f32 %v536, %v467
      %v554 = vmul.f32 %v537, %v470
      %v555 = vmul.f32 %v538, %v472
      %560 = vrot.lane.b32.xlu0 %v552, 120
      %v561 = vpop.permute.xlu0 %560
      %562 = vrot.lane.b32.xlu0 %v553, 120
      %v563 = vpop.permute.xlu0 %562
      %564 = vrot.lane.b32.xlu0 %v554, 120
      %v565 = vpop.permute.xlu0 %564
      %566 = vrot.lane.b32.xlu0 %v555, 120
      %v567 = vpop.permute.xlu0 %566
      %v572 = vadd.f32 %v548, %v561
      %v573 = vadd.f32 %v549, %v563
      %v574 = vadd.f32 %v550, %v565
      %v575 = vadd.f32 %v551, %v567
      %vm576 = vcmask 130048
      %577 = vst.msk [vmem:[#allocation2] sm:$0xff] %vm576, %v572
      %578 = vst.msk [vmem:[#allocation2 + $0x8] sm:$0xff] %vm576, %v573
      %579 = vst.msk [vmem:[#allocation2 + $0x10] sm:$0xff] %vm576, %v574
      %580 = vst.msk [vmem:[#allocation2 + $0x18] sm:$0xff] %vm576, %v575
      %p581 = scmp.eq.s32.totalorder %s26, 7
      // Predicated region
      $region57: #{bevfusion_forward.3} parent=51 // pred_check
        %p582 = pneg %p581
      $region58: #{bevfusion_forward.3} parent=51 // pred_check_branch
        %584 = sbr.rel (%p582) target = $region60
      $region59: #{bevfusion_forward.3} parent=51 // pred_region
        %v585 = vld [vmem:[#allocation2] sm:$0xff]
        %v586 = vld [vmem:[#allocation2 + $0x8] sm:$0xff]
        %v587 = vld [vmem:[#allocation2 + $0x10] sm:$0xff]
        %v588 = vld [vmem:[#allocation2 + $0x18] sm:$0xff]
        %v589 = vmul.f32 %v585, 0.25
        %v590 = vmul.f32 %v586, 0.25
        %v591 = vmul.f32 %v587, 0.25
        %v592 = vmul.f32 %v588, 0.25
        %v593 = vpack.c.bf16 %v590, %v589
        %v594 = vpack.c.bf16 %v592, %v591
        %v595 = vld [vmem:[%s6] sm:$0xf]
        %v596 = vld [vmem:[%s6 + $0x4] sm:$0xf]
        %v597 = vld [vmem:[%s7] sm:$0x1]
        %v599 = vperm.slane %v597, 0
        %v603 = vunpack.c.l.b16 %v595
        %v604 = vunpack.c.l.b16 %v596
        %v605 = vpack.c.b16 %v604, %v603
        %v608 = vsel %vm576, %v593, 0
        %v611 = vsel %vm576, %v594, 0
        %613 = vmatpush.bf16.msra.mxu0 0
        %614 = vmatpush.bf16.msra.mxu0 0
        %615 = vmatpush.bf16.msra.mxu0 0
        %616 = vmatpush.bf16.msra.mxu0 0
        %617 = vmatpush.bf16.msra.mxu0 0
        %618 = vmatpush.bf16.msra.mxu0 0
        %619 = vmatpush.bf16.msra.mxu0 0
        %620 = vmatpush.bf16.msra.mxu0 %v605
        %621 = vmatmul.bf16.gmra.mxu0 %v608
        %v622 = vpop.f32.mrf.mxu0
        %v623 = vadd.f32 %v599, %v622
        %v624 = vpop.f32.mrf.mxu0
        %v625 = vadd.f32 %v599, %v624
        %626 = vmatmul.bf16.gmra.mxu0 %v611
        %v627 = vpop.f32.mrf.mxu0
        %v628 = vadd.f32 %v599, %v627
        %v629 = vpop.f32.mrf.mxu0
        %v630 = vadd.f32 %v599, %v629
        %631 = vdwg.mxu0
        %v632 = vpack.c.bf16 %v623, %v623
        %v633 = vpack.c.bf16 %v625, %v625
        %v634 = vpack.c.bf16 %v628, %v628
        %v635 = vpack.c.bf16 %v630, %v630
        %vm636 = vcmask 125952
        %637 = vst.msk [vmem:[%s364] sm:$0xf] %vm636, %v632
        %638 = vst.msk [vmem:[%s364 + $0x4] sm:$0xf] %vm636, %v633
        %639 = vst.msk [vmem:[%s364 + $0x8] sm:$0xf] %vm636, %v634
        %640 = vst.msk [vmem:[%s364 + $0xc] sm:$0xf] %vm636, %v635
      $region60: #{bevfusion_forward.3} parent=51 // pred_fallthru
        _
      %s641 = smul.u32 4, %s25
      %p642 = scmp.lt.s32.totalorder %s24, 1
      %s643 = scalar_select %p642, %s24, 1
      %p644 = scmp.lt.s32.totalorder %s641, 7
      %s645 = scalar_select %p644, %s641, 7
      %s646 = smul.addr %s643, 8
      %s647 = sadd.s32 %s645, %s646
      %s648 = smul.addr %s647, 4
      %s649 = scalar_lea.vmem %s8, %s648
      // Predicated region
      $region61: #{bevfusion_forward.3} parent=51 // pred_check
        %p650 = pneg %p237
      $region62: #{bevfusion_forward.3} parent=51 // pred_check_branch
        %652 = sbr.rel (%p650) target = $region64
      $region63: #{bevfusion_forward.3} parent=51 // pred_region
        %s653 = smul.u32 4, %s25
      $region64: #{bevfusion_forward.3} parent=51 // pred_fallthru
        _
    $region52: #{bevfusion_forward.3} parent=5 // pred_fallthru
      _
    %p654 = scmp.le.s32.totalorder 2, %s14
    // Predicated region
    $region65: #{bevfusion_forward.3} parent=5 // pred_check
      %p655 = pneg %p654
    $region66: #{bevfusion_forward.3} parent=5 // pred_check_branch
      %657 = sbr.rel (%p655) target = $region68
    $region67: #{bevfusion_forward.3} parent=5 // pred_region
      %s658 = ssub.s32 %s14, 2
      // Predicated region
      $region69: #{bevfusion_forward.3} parent=67 // pred_check
        %p659 = pneg %p243
      $region70: #{bevfusion_forward.3} parent=67 // pred_check_branch
        %661 = sbr.rel (%p659) target = $region72
      $region71: #{bevfusion_forward.3} parent=67 // pred_region
        %s662 = smul.u32 4, %s28
        %p663 = scmp.lt.s32.totalorder %s27, 1
        %s664 = scalar_select %p663, %s27, 1
        %p665 = scmp.lt.s32.totalorder %s662, 7
        %s666 = scalar_select %p665, %s662, 7
        %s667 = smul.addr %s664, 8
        %s668 = sadd.s32 %s666, %s667
        %s669 = smul.addr %s668, 4
        %s670 = scalar_lea.vmem %s8, %s669
      $region72: #{bevfusion_forward.3} parent=67 // pred_fallthru
        _
    $region68: #{bevfusion_forward.3} parent=5 // pred_fallthru
      _
  $region6: #{bevfusion_forward.3} parent=0 // loop_footer
    %s18 = sadd.s32 1, %s14
  $region7: #{bevfusion_forward.3} parent=0 // loop_footer_branch
    %13 = sbr.rel target = $region3
  $region8: #{bevfusion_forward.3} parent=0 // loop_exit
    _

// kernel: bevfusion_forward.5
$region0: #{bevfusion_forward.5}
  #allocation0 [shape = 'u32[]', space=smem, size = 0x4, offset = 0x4, fixed_abs, tag = 'smem constant byte address 0x4 - core index']
  #allocation1 [shape = 'u32[72,128]{1,0:T(1,128)}', space=vmem, size = 0x9000, scoped, tag = 'internal scratch']
  %s0 = inlined_call_operand.vmem [shape: bf16[2,64,16], index: 0, kind: input, shape index: {}]
  %s1 = inlined_call_operand.vmem [shape: bf16[2,64,16], index: 1, kind: input, shape index: {}]
  %s2 = inlined_call_operand.vmem [shape: bf16[16,128], index: 2, kind: input, shape index: {}]
  %s3 = inlined_call_operand.vmem [shape: bf16[16,128], index: 3, kind: input, shape index: {}]
  %s4 = inlined_call_operand.vmem [shape: f32[1,128], index: 4, kind: input, shape index: {}]
  %s5 = inlined_call_operand.vmem [shape: bf16[128,128], index: 5, kind: input, shape index: {}]
  %s6 = inlined_call_operand.vmem [shape: f32[1,128], index: 6, kind: input, shape index: {}]
  %s7 = inlined_call_operand.vmem [shape: f32[2,64,128], index: 7, kind: output, shape index: {0}]
  %s8 = inlined_call_operand.vmem [shape: f32[2,64,128], index: 8, kind: output, shape index: {1}]
  %9 = xla_tuple %s7, %s8
  %s10 = sld [smem:[#allocation0]]
  $region69: #{bevfusion_forward.5} parent=0
    _
  %s12 = ssub.s32 1, %s10
  %s13 = scalar_select 0, %s12, %s10
  loop: start=0, step=1, limit=6
  $region2: #{bevfusion_forward.5} parent=0 // loop_pre_header
    _
  $region3: #{bevfusion_forward.5} parent=0 // loop_header
    %s15 = sphi 0, %s19
    %p16 = scmp.ge.s32.totalorder %s15, 6
    %s22 = sphi 0, %s34
    %s23 = sphi 0, %s30
    %s24 = sphi 0, %s22
    %s25 = sphi 0, %s23
    %s26 = sphi 0, %s24
    %s27 = sphi 0, %s25
    %s39 = sphi 0, %s41
    %s42 = sphi 0, %s39
    %s43 = sphi 0, %s42
    %s59 = sphi 0, %s43
    %s67 = sphi 0, %s69
    %s70 = sphi 0, %s67
    %s71 = sphi 0, %s70
    %s87 = sphi 0, %s71
    %s91 = sphi 0, %s91
    %s93 = sphi 0, %s91
    %s94 = sphi 0, %s93
    %s108 = sphi 0, %s94
    %s112 = sphi 0, %s112
    %s114 = sphi 0, %s112
    %s115 = sphi 0, %s114
    %s129 = sphi 0, %s115
    %s133 = sphi 0, %s133
    %s135 = sphi 0, %s133
    %s136 = sphi 0, %s135
    %s150 = sphi 0, %s136
    %s154 = sphi 0, %s154
    %s156 = sphi 0, %s154
    %s157 = sphi 0, %s156
    %s171 = sphi 0, %s157
    %s175 = sphi 0, %s175
    %s177 = sphi 0, %s175
    %s178 = sphi 0, %s177
    %s192 = sphi 0, %s178
    %s200 = sphi 0, %s202
    %s203 = sphi 0, %s200
    %s204 = sphi 0, %s203
    %s220 = sphi 0, %s204
    %s228 = sphi 0, %s230
    %s231 = sphi 0, %s228
    %s232 = sphi 0, %s231
    %s248 = sphi 0, %s232
  $region4: #{bevfusion_forward.5} parent=0 // loop_header_branch
    %18 = sbr.rel (%p16) target = $region8
  $region5: #{bevfusion_forward.5} parent=0 // loop_body
    %s20 = ssub.s32 %s15, 1
    %s21 = ssub.s32 %s15, 2
    %s28 = sadd.s32 1, %s23
    %p29 = scmp.ge.s32.totalorder %s28, 2
    %s30 = scalar_select %p29, 0, %s28
    %s31 = sadd.s32 1, %s22
    %s32 = scalar_select %p29, %s31, %s22
    %p33 = scmp.ge.s32.totalorder %s32, 2
    %s34 = scalar_select %p33, 0, %s32
    %s35 = ssub.s32 %s22, %s34
    %s36 = ssub.s32 %s23, %s30
    %s37 = sor.u32 %s35, %s36
    %p38 = scmp.eq.s32.totalorder %s37, 0
    %s40 = sadd.s32 %s39, 1
    %s41 = scalar_select %p38, %s39, %s40
    %p44 = pneg %p38
    %p45 = scmp.eq.s32.totalorder %s15, 3
    %p46 = por %p44, %p45
    %p47 = scmp.ne.s32.totalorder %s39, %s42
    %p48 = scmp.eq.s32.totalorder %s15, 0
    %p49 = por %p47, %p48
    %p50 = scmp.ne.s32.totalorder %s39, %s42
    %p51 = scmp.eq.s32.totalorder %s20, 3
    %p52 = por %p50, %p51
    %p53 = scmp.ne.s32.totalorder %s42, %s43
    %p54 = scmp.eq.s32.totalorder %s20, 0
    %p55 = por %p53, %p54
    %p56 = scmp.ne.s32.totalorder %s42, %s43
    %p57 = scmp.eq.s32.totalorder %s21, 3
    %p58 = por %p56, %p57
    %p60 = scmp.ne.s32.totalorder %s43, %s59
    %p61 = scmp.eq.s32.totalorder %s21, 0
    %p62 = por %p60, %p61
    %s63 = ssub.s32 %s22, %s34
    %s64 = ssub.s32 %s23, %s30
    %s65 = sor.u32 %s63, %s64
    %p66 = scmp.eq.s32.totalorder %s65, 0
    %s68 = sadd.s32 %s67, 1
    %s69 = scalar_select %p66, %s67, %s68
    %p72 = pneg %p66
    %p73 = scmp.eq.s32.totalorder %s15, 3
    %p74 = por %p72, %p73
    %p75 = scmp.ne.s32.totalorder %s67, %s70
    %p76 = scmp.eq.s32.totalorder %s15, 0
    %p77 = por %p75, %p76
    %p78 = scmp.ne.s32.totalorder %s67, %s70
    %p79 = scmp.eq.s32.totalorder %s20, 3
    %p80 = por %p78, %p79
    %p81 = scmp.ne.s32.totalorder %s70, %s71
    %p82 = scmp.eq.s32.totalorder %s20, 0
    %p83 = por %p81, %p82
    %p84 = scmp.ne.s32.totalorder %s70, %s71
    %p85 = scmp.eq.s32.totalorder %s21, 3
    %p86 = por %p84, %p85
    %p88 = scmp.ne.s32.totalorder %s71, %s87
    %p89 = scmp.eq.s32.totalorder %s21, 0
    %p90 = por %p88, %p89
    %s92 = sadd.s32 %s91, 1
    %p95 = scmp.eq.s32.totalorder %s15, 3
    %p96 = scmp.ne.s32.totalorder %s91, %s93
    %p97 = scmp.eq.s32.totalorder %s15, 0
    %p98 = por %p96, %p97
    %p99 = scmp.ne.s32.totalorder %s91, %s93
    %p100 = scmp.eq.s32.totalorder %s20, 3
    %p101 = por %p99, %p100
    %p102 = scmp.ne.s32.totalorder %s93, %s94
    %p103 = scmp.eq.s32.totalorder %s20, 0
    %p104 = por %p102, %p103
    %p105 = scmp.ne.s32.totalorder %s93, %s94
    %p106 = scmp.eq.s32.totalorder %s21, 3
    %p107 = por %p105, %p106
    %p109 = scmp.ne.s32.totalorder %s94, %s108
    %p110 = scmp.eq.s32.totalorder %s21, 0
    %p111 = por %p109, %p110
    %s113 = sadd.s32 %s112, 1
    %p116 = scmp.eq.s32.totalorder %s15, 3
    %p117 = scmp.ne.s32.totalorder %s112, %s114
    %p118 = scmp.eq.s32.totalorder %s15, 0
    %p119 = por %p117, %p118
    %p120 = scmp.ne.s32.totalorder %s112, %s114
    %p121 = scmp.eq.s32.totalorder %s20, 3
    %p122 = por %p120, %p121
    %p123 = scmp.ne.s32.totalorder %s114, %s115
    %p124 = scmp.eq.s32.totalorder %s20, 0
    %p125 = por %p123, %p124
    %p126 = scmp.ne.s32.totalorder %s114, %s115
    %p127 = scmp.eq.s32.totalorder %s21, 3
    %p128 = por %p126, %p127
    %p130 = scmp.ne.s32.totalorder %s115, %s129
    %p131 = scmp.eq.s32.totalorder %s21, 0
    %p132 = por %p130, %p131
    %s134 = sadd.s32 %s133, 1
    %p137 = scmp.eq.s32.totalorder %s15, 3
    %p138 = scmp.ne.s32.totalorder %s133, %s135
    %p139 = scmp.eq.s32.totalorder %s15, 0
    %p140 = por %p138, %p139
    %p141 = scmp.ne.s32.totalorder %s133, %s135
    %p142 = scmp.eq.s32.totalorder %s20, 3
    %p143 = por %p141, %p142
    %p144 = scmp.ne.s32.totalorder %s135, %s136
    %p145 = scmp.eq.s32.totalorder %s20, 0
    %p146 = por %p144, %p145
    %p147 = scmp.ne.s32.totalorder %s135, %s136
    %p148 = scmp.eq.s32.totalorder %s21, 3
    %p149 = por %p147, %p148
    %p151 = scmp.ne.s32.totalorder %s136, %s150
    %p152 = scmp.eq.s32.totalorder %s21, 0
    %p153 = por %p151, %p152
    %s155 = sadd.s32 %s154, 1
    %p158 = scmp.eq.s32.totalorder %s15, 3
    %p159 = scmp.ne.s32.totalorder %s154, %s156
    %p160 = scmp.eq.s32.totalorder %s15, 0
    %p161 = por %p159, %p160
    %p162 = scmp.ne.s32.totalorder %s154, %s156
    %p163 = scmp.eq.s32.totalorder %s20, 3
    %p164 = por %p162, %p163
    %p165 = scmp.ne.s32.totalorder %s156, %s157
    %p166 = scmp.eq.s32.totalorder %s20, 0
    %p167 = por %p165, %p166
    %p168 = scmp.ne.s32.totalorder %s156, %s157
    %p169 = scmp.eq.s32.totalorder %s21, 3
    %p170 = por %p168, %p169
    %p172 = scmp.ne.s32.totalorder %s157, %s171
    %p173 = scmp.eq.s32.totalorder %s21, 0
    %p174 = por %p172, %p173
    %s176 = sadd.s32 %s175, 1
    %p179 = scmp.eq.s32.totalorder %s15, 3
    %p180 = scmp.ne.s32.totalorder %s175, %s177
    %p181 = scmp.eq.s32.totalorder %s15, 0
    %p182 = por %p180, %p181
    %p183 = scmp.ne.s32.totalorder %s175, %s177
    %p184 = scmp.eq.s32.totalorder %s20, 3
    %p185 = por %p183, %p184
    %p186 = scmp.ne.s32.totalorder %s177, %s178
    %p187 = scmp.eq.s32.totalorder %s20, 0
    %p188 = por %p186, %p187
    %p189 = scmp.ne.s32.totalorder %s177, %s178
    %p190 = scmp.eq.s32.totalorder %s21, 3
    %p191 = por %p189, %p190
    %p193 = scmp.ne.s32.totalorder %s178, %s192
    %p194 = scmp.eq.s32.totalorder %s21, 0
    %p195 = por %p193, %p194
    %s196 = ssub.s32 %s22, %s34
    %s197 = ssub.s32 %s23, %s30
    %s198 = sor.u32 %s196, %s197
    %p199 = scmp.eq.s32.totalorder %s198, 0
    %s201 = sadd.s32 %s200, 1
    %s202 = scalar_select %p199, %s200, %s201
    %p205 = pneg %p199
    %p206 = scmp.eq.s32.totalorder %s15, 3
    %p207 = por %p205, %p206
    %p208 = scmp.ne.s32.totalorder %s200, %s203
    %p209 = scmp.eq.s32.totalorder %s15, 0
    %p210 = por %p208, %p209
    %p211 = scmp.ne.s32.totalorder %s200, %s203
    %p212 = scmp.eq.s32.totalorder %s20, 3
    %p213 = por %p211, %p212
    %p214 = scmp.ne.s32.totalorder %s203, %s204
    %p215 = scmp.eq.s32.totalorder %s20, 0
    %p216 = por %p214, %p215
    %p217 = scmp.ne.s32.totalorder %s203, %s204
    %p218 = scmp.eq.s32.totalorder %s21, 3
    %p219 = por %p217, %p218
    %p221 = scmp.ne.s32.totalorder %s204, %s220
    %p222 = scmp.eq.s32.totalorder %s21, 0
    %p223 = por %p221, %p222
    %s224 = ssub.s32 %s22, %s34
    %s225 = ssub.s32 %s23, %s30
    %s226 = sor.u32 %s224, %s225
    %p227 = scmp.eq.s32.totalorder %s226, 0
    %s229 = sadd.s32 %s228, 1
    %s230 = scalar_select %p227, %s228, %s229
    %p233 = pneg %p227
    %p234 = scmp.eq.s32.totalorder %s15, 3
    %p235 = por %p233, %p234
    %p236 = scmp.ne.s32.totalorder %s228, %s231
    %p237 = scmp.eq.s32.totalorder %s15, 0
    %p238 = por %p236, %p237
    %p239 = scmp.ne.s32.totalorder %s228, %s231
    %p240 = scmp.eq.s32.totalorder %s20, 3
    %p241 = por %p239, %p240
    %p242 = scmp.ne.s32.totalorder %s231, %s232
    %p243 = scmp.eq.s32.totalorder %s20, 0
    %p244 = por %p242, %p243
    %p245 = scmp.ne.s32.totalorder %s231, %s232
    %p246 = scmp.eq.s32.totalorder %s21, 3
    %p247 = por %p245, %p246
    %p249 = scmp.ne.s32.totalorder %s232, %s248
    %p250 = scmp.eq.s32.totalorder %s21, 0
    %p251 = por %p249, %p250
    %p252 = scmp.le.s32.totalorder 1, %s15
    %p253 = scmp.lt.s32.totalorder %s15, 5
    %p254 = pnand %p252, %p253
    %p255 = pneg %p254
    // Predicated region
    $region9: #{bevfusion_forward.5} parent=5 // pred_check
      _
    $region10: #{bevfusion_forward.5} parent=5 // pred_check_branch
      %257 = sbr.rel (%p254) target = $region12
    $region11: #{bevfusion_forward.5} parent=5 // pred_region
      %s258 = ssub.s32 %s15, 1
      // Predicated region
      $region13: #{bevfusion_forward.5} parent=11 // pred_check
        %p259 = pneg %p104
      $region14: #{bevfusion_forward.5} parent=11 // pred_check_branch
        %261 = sbr.rel (%p259) target = $region16
      $region15: #{bevfusion_forward.5} parent=11 // pred_region
        _
      $region16: #{bevfusion_forward.5} parent=11 // pred_fallthru
        _
      // Predicated region
      $region17: #{bevfusion_forward.5} parent=11 // pred_check
        %p262 = pneg %p125
      $region18: #{bevfusion_forward.5} parent=11 // pred_check_branch
        %264 = sbr.rel (%p262) target = $region20
      $region19: #{bevfusion_forward.5} parent=11 // pred_region
        _
      $region20: #{bevfusion_forward.5} parent=11 // pred_fallthru
        _
      // Predicated region
      $region21: #{bevfusion_forward.5} parent=11 // pred_check
        %p265 = pneg %p146
      $region22: #{bevfusion_forward.5} parent=11 // pred_check_branch
        %267 = sbr.rel (%p265) target = $region24
      $region23: #{bevfusion_forward.5} parent=11 // pred_region
        _
      $region24: #{bevfusion_forward.5} parent=11 // pred_fallthru
        _
      // Predicated region
      $region25: #{bevfusion_forward.5} parent=11 // pred_check
        %p268 = pneg %p167
      $region26: #{bevfusion_forward.5} parent=11 // pred_check_branch
        %270 = sbr.rel (%p268) target = $region28
      $region27: #{bevfusion_forward.5} parent=11 // pred_region
        _
      $region28: #{bevfusion_forward.5} parent=11 // pred_fallthru
        _
      // Predicated region
      $region29: #{bevfusion_forward.5} parent=11 // pred_check
        %p271 = pneg %p188
      $region30: #{bevfusion_forward.5} parent=11 // pred_check_branch
        %273 = sbr.rel (%p271) target = $region32
      $region31: #{bevfusion_forward.5} parent=11 // pred_region
        _
      $region32: #{bevfusion_forward.5} parent=11 // pred_fallthru
        _
    $region12: #{bevfusion_forward.5} parent=5 // pred_fallthru
      _
    %p274 = scmp.lt.s32.totalorder %s15, 4
    // Predicated region
    $region33: #{bevfusion_forward.5} parent=5 // pred_check
      %p275 = pneg %p274
    $region34: #{bevfusion_forward.5} parent=5 // pred_check_branch
      %277 = sbr.rel (%p275) target = $region36
    $region35: #{bevfusion_forward.5} parent=5 // pred_region
      // Predicated region
      $region37: #{bevfusion_forward.5} parent=35 // pred_check
        %p278 = pneg %p49
      $region38: #{bevfusion_forward.5} parent=35 // pred_check_branch
        %280 = sbr.rel (%p278) target = $region40
      $region39: #{bevfusion_forward.5} parent=35 // pred_region
        %s281 = smul.u32 4, %s23
        %p282 = scmp.lt.s32.totalorder %s22, 1
        %s283 = scalar_select %p282, %s22, 1
        %p284 = scmp.lt.s32.totalorder %s281, 7
        %s285 = scalar_select %p284, %s281, 7
        %s286 = smul.addr %s283, 8
        %s287 = sadd.s32 %s285, %s286
        %s288 = smul.addr %s287, 4
        %s289 = scalar_lea.vmem %s0, %s288
        %s290 = smul.u32 4, %s23
      $region40: #{bevfusion_forward.5} parent=35 // pred_fallthru
        _
      // Predicated region
      $region41: #{bevfusion_forward.5} parent=35 // pred_check
        %p291 = pneg %p77
      $region42: #{bevfusion_forward.5} parent=35 // pred_check_branch
        %293 = sbr.rel (%p291) target = $region44
      $region43: #{bevfusion_forward.5} parent=35 // pred_region
        %s294 = smul.u32 4, %s23
        %p295 = scmp.lt.s32.totalorder %s22, 1
        %s296 = scalar_select %p295, %s22, 1
        %p297 = scmp.lt.s32.totalorder %s294, 7
        %s298 = scalar_select %p297, %s294, 7
        %s299 = smul.addr %s296, 8
        %s300 = sadd.s32 %s298, %s299
        %s301 = smul.addr %s300, 4
        %s302 = scalar_lea.vmem %s1, %s301
        %s303 = smul.u32 4, %s23
      $region44: #{bevfusion_forward.5} parent=35 // pred_fallthru
        _
    $region36: #{bevfusion_forward.5} parent=5 // pred_fallthru
      _
    %p304 = scmp.le.s32.totalorder 1, %s15
    %p305 = scmp.lt.s32.totalorder %s15, 5
    %p306 = pnand %p304, %p305
    %p307 = pneg %p306
    // Predicated region
    $region45: #{bevfusion_forward.5} parent=5 // pred_check
      _
    $region46: #{bevfusion_forward.5} parent=5 // pred_check_branch
      %309 = sbr.rel (%p306) target = $region48
    $region47: #{bevfusion_forward.5} parent=5 // pred_region
      %s310 = ssub.s32 %s15, 1
      %s311 = smul.u32 4, %s25
      %p312 = scmp.lt.s32.totalorder %s24, 1
      %s313 = scalar_select %p312, %s24, 1
      %p314 = scmp.lt.s32.totalorder %s311, 7
      %s315 = scalar_select %p314, %s311, 7
      %s316 = smul.addr %s313, 8
      %s317 = sadd.s32 %s315, %s316
      %s318 = smul.addr %s317, 4
      %s319 = scalar_lea.vmem %s0, %s318
      %p320 = pneg %p55
      %p321 = pneg %p52
      %s322 = smul.u32 4, %s25
      %p323 = scmp.lt.s32.totalorder %s24, 1
      %s324 = scalar_select %p323, %s24, 1
      %p325 = scmp.lt.s32.totalorder %s322, 7
      %s326 = scalar_select %p325, %s322, 7
      %s327 = smul.addr %s324, 8
      %s328 = sadd.s32 %s326, %s327
      %s329 = smul.addr %s328, 4
      %s330 = scalar_lea.vmem %s1, %s329
      %p331 = pneg %p83
      %p332 = pneg %p80
      %p333 = pneg %p104
      %p334 = pneg %p101
      %p335 = pneg %p125
      %p336 = pneg %p122
      %p337 = pneg %p146
      %p338 = pneg %p143
      %p339 = pneg %p167
      %p340 = pneg %p164
      %p341 = pneg %p188
      %p342 = pneg %p185
      %p343 = pneg %p216
      %p344 = pneg %p213
      %s345 = smul.u32 4, %s25
      %p346 = scmp.lt.s32.totalorder %s24, 1
      %s347 = scalar_select %p346, %s24, 1
      %p348 = scmp.lt.s32.totalorder %s345, 7
      %s349 = scalar_select %p348, %s345, 7
      %s350 = smul.addr %s347, 8
      %s351 = sadd.s32 %s349, %s350
      %s352 = smul.addr %s351, 8
      %s353 = scalar_lea.vmem %s7, %s352
      %p354 = pneg %p244
      %p355 = pneg %p241
      %s356 = smul.u32 4, %s25
      %p357 = scmp.lt.s32.totalorder %s24, 1
      %s358 = scalar_select %p357, %s24, 1
      %p359 = scmp.lt.s32.totalorder %s356, 7
      %s360 = scalar_select %p359, %s356, 7
      %s361 = smul.addr %s358, 8
      %s362 = sadd.s32 %s360, %s361
      %s363 = smul.addr %s362, 8
      %s364 = scalar_lea.vmem %s8, %s363
      %s365 = smul.u32 4, %s25
      %p366 = scmp.lt.s32.totalorder %s24, 1
      %s367 = scalar_select %p366, %s24, 1
      %p368 = scmp.lt.s32.totalorder %s365, 7
      %s369 = scalar_select %p368, %s365, 7
      %s370 = smul.addr %s367, 8
      %s371 = sadd.s32 %s369, %s370
      %s372 = smul.addr %s371, 4
      %s373 = scalar_lea.vmem %s0, %s372
      %s374 = smul.u32 4, %s25
      %s375 = smul.u32 4, %s25
      %p376 = scmp.lt.s32.totalorder %s24, 1
      %s377 = scalar_select %p376, %s24, 1
      %p378 = scmp.lt.s32.totalorder %s375, 7
      %s379 = scalar_select %p378, %s375, 7
      %s380 = smul.addr %s377, 8
      %s381 = sadd.s32 %s379, %s380
      %s382 = smul.addr %s381, 4
      %s383 = scalar_lea.vmem %s1, %s382
      %s384 = smul.u32 4, %s25
      %s385 = smul.u32 4, %s25
      %p386 = scmp.lt.s32.totalorder %s24, 1
      %s387 = scalar_select %p386, %s24, 1
      %p388 = scmp.lt.s32.totalorder %s385, 7
      %s389 = scalar_select %p388, %s385, 7
      %s390 = smul.addr %s387, 8
      %s391 = sadd.s32 %s389, %s390
      %s392 = smul.addr %s391, 8
      %s393 = scalar_lea.vmem %s7, %s392
      %s394 = smul.u32 4, %s25
      %s395 = smul.u32 4, %s25
      %p396 = scmp.lt.s32.totalorder %s24, 1
      %s397 = scalar_select %p396, %s24, 1
      %p398 = scmp.lt.s32.totalorder %s395, 7
      %s399 = scalar_select %p398, %s395, 7
      %s400 = smul.addr %s397, 8
      %s401 = sadd.s32 %s399, %s400
      %s402 = smul.addr %s401, 8
      %s403 = scalar_lea.vmem %s8, %s402
      %s404 = smul.u32 4, %s25
      %v406 = vld [vmem:[%s373] sm:$0xf]
      %v407 = vld [vmem:[%s373 + $0x4] sm:$0xf]
      %v408 = vld [vmem:[%s373 + $0x8] sm:$0xf]
      %v409 = vld [vmem:[%s373 + $0xc] sm:$0xf]
      %v410 = vld [vmem:[%s2] sm:$0xf]
      %v411 = vld [vmem:[%s2 + $0x4] sm:$0xf]
      %v412 = vld [vmem:[%s383] sm:$0xf]
      %v413 = vld [vmem:[%s383 + $0x4] sm:$0xf]
      %v414 = vld [vmem:[%s383 + $0x8] sm:$0xf]
      %v415 = vld [vmem:[%s383 + $0xc] sm:$0xf]
      %v416 = vld [vmem:[%s3] sm:$0xf]
      %v417 = vld [vmem:[%s3 + $0x4] sm:$0xf]
      %v422 = vunpack.c.l.b16 %v412
      %v423 = vunpack.c.l.b16 %v413
      %v424 = vunpack.c.l.b16 %v414
      %v425 = vunpack.c.l.b16 %v415
      %v426 = vpack.c.b16 %v423, %v422
      %v427 = vpack.c.b16 %v425, %v424
      %v430 = vunpack.c.l.b16 %v416
      %v431 = vunpack.c.l.b16 %v417
      %v432 = vpack.c.b16 %v431, %v430
      %vm434 = vcmask 130048
      %v436 = vsel %vm434, %v426, 0
      %v439 = vsel %vm434, %v427, 0
      %441 = vmatpush.bf16.msra.mxu0 0
      %442 = vmatpush.bf16.msra.mxu0 0
      %443 = vmatpush.bf16.msra.mxu0 0
      %444 = vmatpush.bf16.msra.mxu0 0
      %445 = vmatpush.bf16.msra.mxu0 0
      %446 = vmatpush.bf16.msra.mxu0 0
      %447 = vmatpush.bf16.msra.mxu0 0
      %448 = vmatpush.bf16.msra.mxu0 %v432
      %449 = vmatmul.bf16.gmra.mxu0 %v436
      %v450 = vpop.f32.mrf.mxu0
      %v451 = vadd.f32 0.0, %v450
      %v452 = vpop.f32.mrf.mxu0
      %v453 = vadd.f32 0.0, %v452
      %454 = vmatmul.bf16.gmra.mxu0 %v439
      %v455 = vpop.f32.mrf.mxu0
      %v456 = vadd.f32 0.0, %v455
      %v457 = vpop.f32.mrf.mxu0
      %v458 = vadd.f32 0.0, %v457
      %459 = vdwg.mxu0
      %v464 = vunpack.c.l.b16 %v406
      %v465 = vunpack.c.l.b16 %v407
      %v466 = vunpack.c.l.b16 %v408
      %v467 = vunpack.c.l.b16 %v409
      %v468 = vpack.c.b16 %v465, %v464
      %v469 = vpack.c.b16 %v467, %v466
      %v472 = vunpack.c.l.b16 %v410
      %v473 = vunpack.c.l.b16 %v411
      %v474 = vpack.c.b16 %v473, %v472
      %v477 = vsel %vm434, %v468, 0
      %v480 = vsel %vm434, %v469, 0
      %482 = vmatpush.bf16.msra.mxu0 0
      %483 = vmatpush.bf16.msra.mxu0 0
      %484 = vmatpush.bf16.msra.mxu0 0
      %485 = vmatpush.bf16.msra.mxu0 0
      %486 = vmatpush.bf16.msra.mxu0 0
      %487 = vmatpush.bf16.msra.mxu0 0
      %488 = vmatpush.bf16.msra.mxu0 0
      %489 = vmatpush.bf16.msra.mxu0 %v474
      %490 = vmatmul.bf16.gmra.mxu0 %v477
      %v491 = vpop.f32.mrf.mxu0
      %v492 = vadd.f32 %v451, %v491
      %v493 = vpop.f32.mrf.mxu0
      %v494 = vadd.f32 %v453, %v493
      %495 = vmatmul.bf16.gmra.mxu0 %v480
      %v496 = vpop.f32.mrf.mxu0
      %v497 = vadd.f32 %v456, %v496
      %v498 = vpop.f32.mrf.mxu0
      %v499 = vadd.f32 %v458, %v498
      %500 = vdwg.mxu0
      %v501 = vld [vmem:[%s4] sm:$0x1]
      %v503 = vperm.slane %v501, 0
      %v505 = vadd.f32 %v492, %v503
      %v506 = vadd.f32 %v494, %v503
      %v507 = vadd.f32 %v497, %v503
      %v508 = vadd.f32 %v499, %v503
      %v509 = vmax.f32 %v505, 0.0
      %v510 = vmax.f32 %v506, 0.0
      %v511 = vmax.f32 %v507, 0.0
      %v512 = vmax.f32 %v508, 0.0
      %v513 = vpack.c.bf16 %v510, %v509
      %v514 = vpack.c.bf16 %v512, %v511
      %v515 = vld [vmem:[%s5] sm:$0xf]
      %v516 = vld [vmem:[%s5 + $0x4] sm:$0xf]
      %v517 = vld [vmem:[%s5 + $0x8] sm:$0xf]
      %v518 = vld [vmem:[%s5 + $0xc] sm:$0xf]
      %v519 = vld [vmem:[%s5 + $0x10] sm:$0xf]
      %v520 = vld [vmem:[%s5 + $0x14] sm:$0xf]
      %v521 = vld [vmem:[%s5 + $0x18] sm:$0xf]
      %v522 = vld [vmem:[%s5 + $0x1c] sm:$0xf]
      %v523 = vld [vmem:[%s5 + $0x20] sm:$0xf]
      %v524 = vld [vmem:[%s5 + $0x24] sm:$0xf]
      %v525 = vld [vmem:[%s5 + $0x28] sm:$0xf]
      %v526 = vld [vmem:[%s5 + $0x2c] sm:$0xf]
      %v527 = vld [vmem:[%s5 + $0x30] sm:$0xf]
      %v528 = vld [vmem:[%s5 + $0x34] sm:$0xf]
      %v529 = vld [vmem:[%s5 + $0x38] sm:$0xf]
      %v530 = vld [vmem:[%s5 + $0x3c] sm:$0xf]
      %v531 = vld [vmem:[%s6] sm:$0x1]
      %v533 = vperm.slane %v531, 0
      %v551 = vunpack.c.l.b16 %v515
      %v552 = vunpack.c.l.b16 %v516
      %v553 = vunpack.c.l.b16 %v517
      %v554 = vunpack.c.l.b16 %v518
      %v555 = vunpack.c.l.b16 %v519
      %v556 = vunpack.c.l.b16 %v520
      %v557 = vunpack.c.l.b16 %v521
      %v558 = vunpack.c.l.b16 %v522
      %v559 = vunpack.c.l.b16 %v523
      %v560 = vunpack.c.l.b16 %v524
      %v561 = vunpack.c.l.b16 %v525
      %v562 = vunpack.c.l.b16 %v526
      %v563 = vunpack.c.l.b16 %v527
      %v564 = vunpack.c.l.b16 %v528
      %v565 = vunpack.c.l.b16 %v529
      %v566 = vunpack.c.l.b16 %v530
      %v567 = vpack.c.b16 %v552, %v551
      %v568 = vpack.c.b16 %v554, %v553
      %v569 = vpack.c.b16 %v556, %v555
      %v570 = vpack.c.b16 %v558, %v557
      %v571 = vpack.c.b16 %v560, %v559
      %v572 = vpack.c.b16 %v562, %v561
      %v573 = vpack.c.b16 %v564, %v563
      %v574 = vpack.c.b16 %v566, %v565
      %583 = vmatpush.bf16.msra.mxu0 %v574
      %584 = vmatpush.bf16.msra.mxu0 %v573
      %585 = vmatpush.bf16.msra.mxu0 %v572
      %586 = vmatpush.bf16.msra.mxu0 %v571
      %587 = vmatpush.bf16.msra.mxu0 %v570
      %588 = vmatpush.bf16.msra.mxu0 %v569
      %589 = vmatpush.bf16.msra.mxu0 %v568
      %590 = vmatpush.bf16.msra.mxu0 %v567
      %591 = vmatmul.bf16.gmra.mxu0 %v513
      %v592 = vpop.f32.mrf.mxu0
      %v593 = vadd.f32 %v533, %v592
      %v594 = vpop.f32.mrf.mxu0
      %v595 = vadd.f32 %v533, %v594
      %596 = vmatmul.bf16.gmra.mxu0 %v514
      %v597 = vpop.f32.mrf.mxu0
      %v598 = vadd.f32 %v533, %v597
      %v599 = vpop.f32.mrf.mxu0
      %v600 = vadd.f32 %v533, %v599
      %601 = vdwg.mxu0
      %602 = vst [vmem:[%s393] sm:$0xff] %v509
      %603 = vst [vmem:[%s393 + $0x8] sm:$0xff] %v510
      %604 = vst [vmem:[%s393 + $0x10] sm:$0xff] %v511
      %605 = vst [vmem:[%s393 + $0x18] sm:$0xff] %v512
      %606 = vst [vmem:[%s403] sm:$0xff] %v593
      %607 = vst [vmem:[%s403 + $0x8] sm:$0xff] %v595
      %608 = vst [vmem:[%s403 + $0x10] sm:$0xff] %v598
      %609 = vst [vmem:[%s403 + $0x18] sm:$0xff] %v600
      %s610 = smul.u32 4, %s25
      %p611 = scmp.lt.s32.totalorder %s24, 1
      %s612 = scalar_select %p611, %s24, 1
      %p613 = scmp.lt.s32.totalorder %s610, 7
      %s614 = scalar_select %p613, %s610, 7
      %s615 = smul.addr %s612, 8
      %s616 = sadd.s32 %s614, %s615
      %s617 = smul.addr %s616, 8
      %s618 = scalar_lea.vmem %s7, %s617
      %s619 = smul.u32 4, %s25
      %p620 = scmp.lt.s32.totalorder %s24, 1
      %s621 = scalar_select %p620, %s24, 1
      %p622 = scmp.lt.s32.totalorder %s619, 7
      %s623 = scalar_select %p622, %s619, 7
      %s624 = smul.addr %s621, 8
      %s625 = sadd.s32 %s623, %s624
      %s626 = smul.addr %s625, 8
      %s627 = scalar_lea.vmem %s8, %s626
      // Predicated region
      $region49: #{bevfusion_forward.5} parent=47 // pred_check
        %p628 = pneg %p213
      $region50: #{bevfusion_forward.5} parent=47 // pred_check_branch
        %630 = sbr.rel (%p628) target = $region52
      $region51: #{bevfusion_forward.5} parent=47 // pred_region
        %s631 = smul.u32 4, %s25
      $region52: #{bevfusion_forward.5} parent=47 // pred_fallthru
        _
      // Predicated region
      $region53: #{bevfusion_forward.5} parent=47 // pred_check
        %p632 = pneg %p241
      $region54: #{bevfusion_forward.5} parent=47 // pred_check_branch
        %634 = sbr.rel (%p632) target = $region56
      $region55: #{bevfusion_forward.5} parent=47 // pred_region
        %s635 = smul.u32 4, %s25
      $region56: #{bevfusion_forward.5} parent=47 // pred_fallthru
        _
    $region48: #{bevfusion_forward.5} parent=5 // pred_fallthru
      _
    %p636 = scmp.le.s32.totalorder 2, %s15
    // Predicated region
    $region57: #{bevfusion_forward.5} parent=5 // pred_check
      %p637 = pneg %p636
    $region58: #{bevfusion_forward.5} parent=5 // pred_check_branch
      %639 = sbr.rel (%p637) target = $region60
    $region59: #{bevfusion_forward.5} parent=5 // pred_region
      %s640 = ssub.s32 %s15, 2
      // Predicated region
      $region61: #{bevfusion_forward.5} parent=59 // pred_check
        %p641 = pneg %p219
      $region62: #{bevfusion_forward.5} parent=59 // pred_check_branch
        %643 = sbr.rel (%p641) target = $region64
      $region63: #{bevfusion_forward.5} parent=59 // pred_region
        %s644 = smul.u32 4, %s27
        %p645 = scmp.lt.s32.totalorder %s26, 1
        %s646 = scalar_select %p645, %s26, 1
        %p647 = scmp.lt.s32.totalorder %s644, 7
        %s648 = scalar_select %p647, %s644, 7
        %s649 = smul.addr %s646, 8
        %s650 = sadd.s32 %s648, %s649
        %s651 = smul.addr %s650, 8
        %s652 = scalar_lea.vmem %s7, %s651
      $region64: #{bevfusion_forward.5} parent=59 // pred_fallthru
        _
      // Predicated region
      $region65: #{bevfusion_forward.5} parent=59 // pred_check
        %p653 = pneg %p247
      $region66: #{bevfusion_forward.5} parent=59 // pred_check_branch
        %655 = sbr.rel (%p653) target = $region68
      $region67: #{bevfusion_forward.5} parent=59 // pred_region
        %s656 = smul.u32 4, %s27
        %p657 = scmp.lt.s32.totalorder %s26, 1
        %s658 = scalar_select %p657, %s26, 1
        %p659 = scmp.lt.s32.totalorder %s656, 7
        %s660 = scalar_select %p659, %s656, 7
        %s661 = smul.addr %s658, 8
        %s662 = sadd.s32 %s660, %s661
        %s663 = smul.addr %s662, 8
        %s664 = scalar_lea.vmem %s8, %s663
      $region68: #{bevfusion_forward.5} parent=59 // pred_fallthru
        _
    $region60: #{bevfusion_forward.5} parent=5 // pred_fallthru
      _
  $region6: #{bevfusion_forward.5} parent=0 // loop_footer
    %s19 = sadd.s32 1, %s15
  $region7: #{bevfusion_forward.5} parent=0 // loop_footer_branch
    %14 = sbr.rel target = $region3
  $region8: #{bevfusion_forward.5} parent=0 // loop_exit
    _

</llo_original>
